<compile_context>
chip_gen: v5e
topology: v5e:2x2
jax: 0.10.0
libtpu: 0.0.40
codegen_flags: <defaults>
</compile_context>

<pallas_src>
import jax
import jax.numpy as jnp
import numpy as np
from jax.experimental import pallas as pl

# ---------------- synthetic CLIP-vision config (small) ----------------
BATCH = 2
CHANNELS = 3
IMAGE_SIZE = 16
PATCH_SIZE = 8
HIDDEN = 32
HEADS = 4
HEAD_DIM = HIDDEN // HEADS
INTERMEDIATE = 64
NUM_LAYERS = 3
SELECT_LAYER = -2          # args.mm_vision_select_layer
SELECT_FEATURE = "patch"   # args.mm_vision_select_feature
LN_EPS = 1e-5

NUM_PATCHES = (IMAGE_SIZE // PATCH_SIZE) ** 2
SEQ = NUM_PATCHES + 1      # +1 for CLS token
PATCH_K = CHANNELS * PATCH_SIZE * PATCH_SIZE


# ---------------- in-kernel helpers ----------------
def _ln_std(x):
    """Standardize only (gamma/beta folded into the following projection)."""
    mu = jnp.mean(x, axis=-1, keepdims=True)
    var = jnp.mean(jnp.square(x - mu), axis=-1, keepdims=True)
    return (x - mu) * jax.lax.rsqrt(var + LN_EPS)


# ---------------- fused tower kernel ----------------
def _tower_kernel(tok_ref, w_emb_ref, pre_g_ref, pre_b_ref,
                  wqkv, bqkv, wo, bo, w1, b1, w2, b2, out_ref):
    bsz = out_ref.shape[0]
    num_layers = wqkv.shape[0]          # layers actually needed (static)
    bf16 = jnp.bfloat16

    # ---- embeddings: patch conv + CLS token + pos-emb as ONE f32 matmul ----
    # tok rows are [patch pixels | one-hot(position)]; w_emb rows are
    # [conv weight | pos_emb (row 0 += class_emb)].
    x = jnp.dot(tok_ref[...], w_emb_ref[...],
                preferred_element_type=jnp.float32)            # (B*S, D)

    # ---- pre_layrnorm (full affine: its output is hidden_states[0]) ----
    x = _ln_std(x) * pre_g_ref[...] + pre_b_ref[...]

    for l in range(num_layers):                 # static unroll (tiny L)
        # ---------------- self-attention block ----------------
        h = _ln_std(x)                          # LN1 affine folded into wqkv
        qkv = jnp.dot(h.astype(bf16), wqkv[l],
                      preferred_element_type=jnp.float32) + bqkv[l]   # (B*S, 3D)
        q3 = qkv[:, 0:HIDDEN].reshape(bsz, SEQ, HIDDEN)
        k3 = qkv[:, HIDDEN:2 * HIDDEN].reshape(bsz, SEQ, HIDDEN)
        v3 = qkv[:, 2 * HIDDEN:].reshape(bsz, SEQ, HIDDEN)

        # pack heads into the batch dim: (H*B, S, HEAD_DIM)
        qb = jnp.concatenate(
            [q3[:, :, i * HEAD_DIM:(i + 1) * HEAD_DIM] for i in range(HEADS)], axis=0)
        kb = jnp.concatenate(
            [k3[:, :, i * HEAD_DIM:(i + 1) * HEAD_DIM] for i in range(HEADS)], axis=0)
        vb = jnp.concatenate(
            [v3[:, :, i * HEAD_DIM:(i + 1) * HEAD_DIM] for i in range(HEADS)], axis=0)

        # one batched scores matmul + ONE softmax chain for all heads
        sc = jax.lax.dot_general(qb.astype(bf16), kb.astype(bf16),
                                 (((2,), (2,)), ((0,), (0,))),
                                 preferred_element_type=jnp.float32)  # (H*B,S,S)
        sc = sc - jnp.max(sc, axis=-1, keepdims=True)
        p = jnp.exp(sc)
        # approx reciprocal (EUP); ~1e-3 rel err, inside test tolerance.
        p = p * pl.reciprocal(jnp.sum(p, axis=-1, keepdims=True), approx=True)
        ob = jax.lax.dot_general(p.astype(bf16), vb.astype(bf16),
                                 (((2,), (1,)), ((0,), (0,))),
                                 preferred_element_type=jnp.float32)  # (H*B,S,Hd)

        # reassemble heads along lanes and run ONE K=D output projection
        o = jnp.concatenate(
            [ob[i * bsz:(i + 1) * bsz] for i in range(HEADS)], axis=-1)  # (B,S,D)
        o = o.reshape(bsz * SEQ, HIDDEN)
        x = x + jnp.dot(o.astype(bf16), wo[l],
                        preferred_element_type=jnp.float32) + bo[l]

        # ---------------- MLP block (quick_gelu) ----------------
        h2 = _ln_std(x)                         # LN2 affine folded into w1/b1
        m = jnp.dot(h2.astype(bf16), w1[l],
                    preferred_element_type=jnp.float32) + b1[l]
        m = m * jax.nn.sigmoid(1.702 * m)
        x = x + jnp.dot(m.astype(bf16), w2[l],
                        preferred_element_type=jnp.float32) + b2[l]

    # drop CLS in-kernel: write only the rows the caller consumes.
    x3 = x.reshape(bsz, SEQ, HIDDEN)
    start = SEQ - out_ref.shape[1]              # 1 for "patch", 0 for "cls_patch"
    out_ref[...] = x3[:, start:, :]


# ---------------- wrapper-side weight prep ----------------
_STACK_NAMES = ("wqkv", "bqkv", "wo", "bo", "w1", "b1", "w2", "b2")


def _fold_layer(lp):
    scale = HEAD_DIM ** -0.5
    # fuse QKV, fold q-scale into wq/bq
    wqkv = jnp.concatenate([lp["wq"] * scale, lp["wk"], lp["wv"]], axis=1)  # (D,3D)
    bqkv = jnp.concatenate([lp["bq"] * scale, lp["bk"], lp["bv"]], axis=1)  # (1,3D)
    # fold LN1 gamma/beta into the fused QKV projection
    wqkv_f = lp["ln1_g"].reshape(HIDDEN, 1) * wqkv
    bqkv_f = lp["ln1_b"] @ wqkv + bqkv
    # fold LN2 gamma/beta into fc1
    w1_f = lp["ln2_g"].reshape(HIDDEN, 1) * lp["w1"]
    b1_f = lp["ln2_b"] @ lp["w1"] + lp["b1"]
    return {
        "wqkv": wqkv_f.astype(jnp.bfloat16), "bqkv": bqkv_f,
        "wo": lp["wo"].astype(jnp.bfloat16), "bo": lp["bo"],
        "w1": w1_f.astype(jnp.bfloat16), "b1": b1_f,
        "w2": lp["w2"].astype(jnp.bfloat16), "b2": lp["b2"],
    }


def _stack_layer_weights(layers):
    folded = [_fold_layer(lp) for lp in layers]
    return [jnp.stack([f[name] for f in folded]) for name in _STACK_NAMES]


def extract_patches(images, patch):
    # NCHW -> (B, num_patches, C*P*P), channel-major within a patch
    # (matches nn.Conv2d weight flattening order (C_in, kh, kw)).
    B, C, H, W = images.shape
    nh, nw = H // patch, W // patch
    x = images.reshape(B, C, nh, patch, nw, patch)
    x = x.transpose(0, 2, 4, 1, 3, 5)                        # (B, nh, nw, C, P, P)
    return x.reshape(B, nh * nw, C * patch * patch)


def clip_vision_tower_forward(images, params,
                              select_layer=SELECT_LAYER,
                              select_feature=SELECT_FEATURE):
    """Equivalent of CLIPVisionTower.forward for a batched image tensor."""
    orig_dtype = images.dtype
    images = images.astype(jnp.float32)                      # .to(self.dtype)
    B = images.shape[0]

    # hidden_states[k] = output after k encoder layers (k=0: pre-LN embeddings).
    # With select_layer=-2 the final layer's output is never consumed, so we
    # only run the layers that are actually needed.
    n_hidden = NUM_LAYERS + 1
    idx = select_layer if select_layer >= 0 else n_hidden + select_layer
    num_used = idx
    assert 1 <= num_used <= NUM_LAYERS, "select_layer must hit a layer output"

    if select_feature == "patch":
        rows_out = NUM_PATCHES
    elif select_feature == "cls_patch":
        rows_out = SEQ
    else:
        raise ValueError(f"Unexpected select feature: {select_feature}")

    # ---- augmented token matrix: CLS + pos-emb folded into the embed matmul ----
    patches = extract_patches(images, PATCH_SIZE)                        # (B,N,K)
    patches = jnp.concatenate(
        [jnp.zeros((B, 1, PATCH_K), jnp.float32), patches], axis=1)      # (B,S,K)
    pos_onehot = jnp.broadcast_to(
        jnp.eye(SEQ, dtype=jnp.float32)[None], (B, SEQ, SEQ))
    tok = jnp.concatenate([patches, pos_onehot], axis=-1)                # (B,S,K+S)
    tok = tok.reshape(B * SEQ, PATCH_K + SEQ)

    pos_plus_cls = params["pos_emb"].at[0:1].add(params["class_emb"])    # (S,D)
    w_emb = jnp.concatenate([params["w_patch_mat"], pos_plus_cls], axis=0)  # (K+S,D)

    stacked = _stack_layer_weights(params["layers"][:num_used])

    feats = pl.pallas_call(
        _tower_kernel,
        out_shape=jax.ShapeDtypeStruct((B, rows_out, HIDDEN), jnp.float32),
    )(tok, w_emb, params["pre_ln_g"], params["pre_ln_b"], *stacked)

    return feats.astype(orig_dtype)                          # .to(image.dtype)
    # TODO(synk): HF post_layernorm only applies to last_hidden_state / pooled
    # output, never to hidden_states[select_layer], so it is omitted.


# ---------------- plain-JAX reference (sanity check) ----------------
def _ref_ln(x, g, b):
    mu = jnp.mean(x, axis=-1, keepdims=True)
    var = jnp.mean(jnp.square(x - mu), axis=-1, keepdims=True)
    return (x - mu) * jax.lax.rsqrt(var + LN_EPS) * g + b


def reference_forward(images, params):
    B = images.shape[0]
    patches = extract_patches(images, PATCH_SIZE)
    pe = (patches.reshape(B * NUM_PATCHES, -1) @ params["w_patch_mat"]
          ).reshape(B, NUM_PATCHES, HIDDEN)
    cls = jnp.broadcast_to(params["class_emb"].reshape(1, 1, HIDDEN),
                           (B, 1, HIDDEN))
    x = jnp.concatenate([cls, pe], axis=1) + params["pos_emb"][None]
    x = _ref_ln(x, params["pre_ln_g"], params["pre_ln_b"])
    hs = [x]
    for lp in params["layers"]:
        h = _ref_ln(x, lp["ln1_g"], lp["ln1_b"])
        q = (h @ lp["wq"] + lp["bq"]) * (HEAD_DIM ** -0.5)
        k = h @ lp["wk"] + lp["bk"]
        v = h @ lp["wv"] + lp["bv"]
        q = q.reshape(B, SEQ, HEADS, HEAD_DIM).transpose(0, 2, 1, 3)
        k = k.reshape(B, SEQ, HEADS, HEAD_DIM).transpose(0, 2, 1, 3)
        v = v.reshape(B, SEQ, HEADS, HEAD_DIM).transpose(0, 2, 1, 3)
        s = jnp.einsum("bhqd,bhkd->bhqk", q, k)
        p = jax.nn.softmax(s, axis=-1)
        o = jnp.einsum("bhqk,bhkd->bhqd", p, v)
        o = o.transpose(0, 2, 1, 3).reshape(B, SEQ, HIDDEN)
        x = x + (o @ lp["wo"] + lp["bo"])
        h2 = _ref_ln(x, lp["ln2_g"], lp["ln2_b"])
        m = h2 @ lp["w1"] + lp["b1"]
        m = m * jax.nn.sigmoid(1.702 * m)
        x = x + (m @ lp["w2"] + lp["b2"])
        hs.append(x)
    feats = hs[SELECT_LAYER]
    return feats[:, 1:] if SELECT_FEATURE == "patch" else feats


# ---------------- deterministic parameter init ----------------
def init_params(key):
    keys = iter(jax.random.split(key, 64))

    def nrm(shape, scale=0.02):
        return scale * jax.random.normal(next(keys), shape, jnp.float32)

    K = CHANNELS * PATCH_SIZE * PATCH_SIZE
    w_patch = nrm((HIDDEN, CHANNELS, PATCH_SIZE, PATCH_SIZE))  # conv (out,in,kh,kw)
    params = {
        "w_patch_mat": w_patch.reshape(HIDDEN, K).T,           # (C*P*P, D)
        "class_emb": nrm((1, HIDDEN)),
        "pos_emb": nrm((SEQ, HIDDEN)),
        "pre_ln_g": jnp.ones((1, HIDDEN), jnp.float32),
        "pre_ln_b": jnp.zeros((1, HIDDEN), jnp.float32),
        "layers": [],
    }
    for _ in range(NUM_LAYERS):
        params["layers"].append({
            "ln1_g": jnp.ones((1, HIDDEN), jnp.float32),
            "ln1_b": jnp.zeros((1, HIDDEN), jnp.float32),
            "wq": nrm((HIDDEN, HIDDEN)), "bq": nrm((1, HIDDEN)),
            "wk": nrm((HIDDEN, HIDDEN)), "bk": nrm((1, HIDDEN)),
            "wv": nrm((HIDDEN, HIDDEN)), "bv": nrm((1, HIDDEN)),
            "wo": nrm((HIDDEN, HIDDEN)), "bo": nrm((1, HIDDEN)),
            "ln2_g": jnp.ones((1, HIDDEN), jnp.float32),
            "ln2_b": jnp.zeros((1, HIDDEN), jnp.float32),
            "w1": nrm((HIDDEN, INTERMEDIATE)), "b1": nrm((1, INTERMEDIATE)),
            "w2": nrm((INTERMEDIATE, HIDDEN)), "b2": nrm((1, HIDDEN)),
        })
    return params


if __name__ == "__main__":
    key = jax.random.PRNGKey(0)
    pkey, xkey = jax.random.split(key)
    params = init_params(pkey)
    images = jax.random.normal(
        xkey, (BATCH, CHANNELS, IMAGE_SIZE, IMAGE_SIZE), jnp.float32)

    feats = clip_vision_tower_forward(images, params)
    feats = jax.block_until_ready(feats)

    assert feats.shape == (BATCH, NUM_PATCHES, HIDDEN), feats.shape
    assert bool(jnp.all(jnp.isfinite(feats)))

    ref = jax.block_until_ready(reference_forward(images, params))
    np.testing.assert_allclose(np.asarray(feats), np.asarray(ref),
                               rtol=2e-2, atol=2e-2)

    print("KERNEL_OK")
</pallas_src>

<mosaic_0001>
module attributes {stable_mosaic.version = 11 : i64} {
  func.func @_tower_kernel(%arg0: memref<10x197xf32, #tpu.memory_space<vmem>>, %arg1: memref<197x32xf32, #tpu.memory_space<vmem>>, %arg2: memref<1x32xf32, #tpu.memory_space<vmem>>, %arg3: memref<1x32xf32, #tpu.memory_space<vmem>>, %arg4: memref<2x32x96xbf16, #tpu.memory_space<vmem>>, %arg5: memref<2x1x96xf32, #tpu.memory_space<vmem>>, %arg6: memref<2x32x32xbf16, #tpu.memory_space<vmem>>, %arg7: memref<2x1x32xf32, #tpu.memory_space<vmem>>, %arg8: memref<2x32x64xbf16, #tpu.memory_space<vmem>>, %arg9: memref<2x1x64xf32, #tpu.memory_space<vmem>>, %arg10: memref<2x64x32xbf16, #tpu.memory_space<vmem>>, %arg11: memref<2x1x32xf32, #tpu.memory_space<vmem>>, %arg12: memref<2x4x32xf32, #tpu.memory_space<vmem>>) attributes {dimension_semantics = [], scalar_prefetch = 0 : i64, scratch_operands = 0 : i64, tpu.core_type = #tpu.core_type<tc>} {
    %c0 = arith.constant 0 : index
    %c0_0 = arith.constant 0 : index
    %0 = vector.load %arg0[%c0, %c0_0] : memref<10x197xf32, #tpu.memory_space<vmem>>, vector<10x197xf32>
    %c0_1 = arith.constant 0 : index
    %c0_2 = arith.constant 0 : index
    %1 = vector.load %arg1[%c0_1, %c0_2] : memref<197x32xf32, #tpu.memory_space<vmem>>, vector<197x32xf32>
    %cst = arith.constant dense<0.000000e+00> : vector<10x32xf32>
    %2 = tpu.matmul %0, %1, %cst {dimension_numbers = #tpu.dot_dimension_numbers<[1], [0], [0], [1], [0, 0, 1, 1], [], []>} : vector<10x197xf32>, vector<197x32xf32>, vector<10x32xf32> -> vector<10x32xf32>
    %cst_3 = arith.constant dense<0.000000e+00> : vector<10xf32>
    %3 = vector.multi_reduction <add>, %2, %cst_3 [1] : vector<10x32xf32> to vector<10xf32>
    %4 = vector.shape_cast %3 : vector<10xf32> to vector<10x1xf32>
    %cst_4 = arith.constant 3.200000e+01 : f32
    %5 = vector.broadcast %cst_4 : f32 to vector<10x1xf32>
    %6 = arith.divf %4, %5 : vector<10x1xf32>
    %7 = vector.broadcast %6 : vector<10x1xf32> to vector<10x32xf32>
    %8 = arith.subf %2, %7 : vector<10x32xf32>
    %9 = arith.mulf %8, %8 : vector<10x32xf32>
    %cst_5 = arith.constant dense<0.000000e+00> : vector<10xf32>
    %10 = vector.multi_reduction <add>, %9, %cst_5 [1] : vector<10x32xf32> to vector<10xf32>
    %11 = vector.shape_cast %10 : vector<10xf32> to vector<10x1xf32>
    %cst_6 = arith.constant 3.200000e+01 : f32
    %12 = vector.broadcast %cst_6 : f32 to vector<10x1xf32>
    %13 = arith.divf %11, %12 : vector<10x1xf32>
    %14 = vector.broadcast %6 : vector<10x1xf32> to vector<10x32xf32>
    %15 = arith.subf %2, %14 : vector<10x32xf32>
    %cst_7 = arith.constant 9.99999974E-6 : f32
    %16 = vector.broadcast %cst_7 : f32 to vector<10x1xf32>
    %17 = arith.addf %13, %16 : vector<10x1xf32>
    %18 = math.rsqrt %17 : vector<10x1xf32>
    %19 = vector.broadcast %18 : vector<10x1xf32> to vector<10x32xf32>
    %20 = arith.mulf %15, %19 : vector<10x32xf32>
    %c0_8 = arith.constant 0 : index
    %c0_9 = arith.constant 0 : index
    %21 = vector.load %arg2[%c0_8, %c0_9] : memref<1x32xf32, #tpu.memory_space<vmem>>, vector<1x32xf32>
    %22 = vector.broadcast %21 : vector<1x32xf32> to vector<10x32xf32>
    %23 = arith.mulf %20, %22 : vector<10x32xf32>
    %c0_10 = arith.constant 0 : index
    %c0_11 = arith.constant 0 : index
    %24 = vector.load %arg3[%c0_10, %c0_11] : memref<1x32xf32, #tpu.memory_space<vmem>>, vector<1x32xf32>
    %25 = vector.broadcast %24 : vector<1x32xf32> to vector<10x32xf32>
    %26 = arith.addf %23, %25 : vector<10x32xf32>
    %cst_12 = arith.constant dense<0.000000e+00> : vector<10xf32>
    %27 = vector.multi_reduction <add>, %26, %cst_12 [1] : vector<10x32xf32> to vector<10xf32>
    %28 = vector.shape_cast %27 : vector<10xf32> to vector<10x1xf32>
    %cst_13 = arith.constant 3.200000e+01 : f32
    %29 = vector.broadcast %cst_13 : f32 to vector<10x1xf32>
    %30 = arith.divf %28, %29 : vector<10x1xf32>
    %31 = vector.broadcast %30 : vector<10x1xf32> to vector<10x32xf32>
    %32 = arith.subf %26, %31 : vector<10x32xf32>
    %33 = arith.mulf %32, %32 : vector<10x32xf32>
    %cst_14 = arith.constant dense<0.000000e+00> : vector<10xf32>
    %34 = vector.multi_reduction <add>, %33, %cst_14 [1] : vector<10x32xf32> to vector<10xf32>
    %35 = vector.shape_cast %34 : vector<10xf32> to vector<10x1xf32>
    %cst_15 = arith.constant 3.200000e+01 : f32
    %36 = vector.broadcast %cst_15 : f32 to vector<10x1xf32>
    %37 = arith.divf %35, %36 : vector<10x1xf32>
    %38 = vector.broadcast %30 : vector<10x1xf32> to vector<10x32xf32>
    %39 = arith.subf %26, %38 : vector<10x32xf32>
    %cst_16 = arith.constant 9.99999974E-6 : f32
    %40 = vector.broadcast %cst_16 : f32 to vector<10x1xf32>
    %41 = arith.addf %37, %40 : vector<10x1xf32>
    %42 = math.rsqrt %41 : vector<10x1xf32>
    %43 = vector.broadcast %42 : vector<10x1xf32> to vector<10x32xf32>
    %44 = arith.mulf %39, %43 : vector<10x32xf32>
    %45 = arith.truncf %44 : vector<10x32xf32> to vector<10x32xbf16>
    %c0_17 = arith.constant 0 : index
    %c0_18 = arith.constant 0 : index
    %c0_19 = arith.constant 0 : index
    %46 = vector.load %arg4[%c0_17, %c0_18, %c0_19] : memref<2x32x96xbf16, #tpu.memory_space<vmem>>, vector<1x32x96xbf16>
    %47 = vector.shape_cast %46 : vector<1x32x96xbf16> to vector<32x96xbf16>
    %cst_20 = arith.constant dense<0.000000e+00> : vector<10x96xf32>
    %48 = tpu.matmul %45, %47, %cst_20 {dimension_numbers = #tpu.dot_dimension_numbers<[1], [0], [0], [1], [0, 0, 1, 1], [], []>} : vector<10x32xbf16>, vector<32x96xbf16>, vector<10x96xf32> -> vector<10x96xf32>
    %c0_21 = arith.constant 0 : index
    %c0_22 = arith.constant 0 : index
    %c0_23 = arith.constant 0 : index
    %49 = vector.load %arg5[%c0_21, %c0_22, %c0_23] : memref<2x1x96xf32, #tpu.memory_space<vmem>>, vector<1x1x96xf32>
    %50 = vector.shape_cast %49 : vector<1x1x96xf32> to vector<1x96xf32>
    %51 = vector.broadcast %50 : vector<1x96xf32> to vector<10x96xf32>
    %52 = arith.addf %48, %51 : vector<10x96xf32>
    %53 = vector.extract_strided_slice %52 {offsets = [0, 0], sizes = [10, 32], strides = [1, 1]} : vector<10x96xf32> to vector<10x32xf32>
    %54 = vector.shape_cast %53 : vector<10x32xf32> to vector<2x5x32xf32>
    %55 = vector.extract_strided_slice %52 {offsets = [0, 32], sizes = [10, 32], strides = [1, 1]} : vector<10x96xf32> to vector<10x32xf32>
    %56 = vector.shape_cast %55 : vector<10x32xf32> to vector<2x5x32xf32>
    %57 = vector.extract_strided_slice %52 {offsets = [0, 64], sizes = [10, 32], strides = [1, 1]} : vector<10x96xf32> to vector<10x32xf32>
    %58 = vector.shape_cast %57 : vector<10x32xf32> to vector<2x5x32xf32>
    %59 = vector.extract_strided_slice %54 {offsets = [0, 0, 0], sizes = [2, 5, 8], strides = [1, 1, 1]} : vector<2x5x32xf32> to vector<2x5x8xf32>
    %60 = vector.extract_strided_slice %54 {offsets = [0, 0, 8], sizes = [2, 5, 8], strides = [1, 1, 1]} : vector<2x5x32xf32> to vector<2x5x8xf32>
    %61 = vector.extract_strided_slice %54 {offsets = [0, 0, 16], sizes = [2, 5, 8], strides = [1, 1, 1]} : vector<2x5x32xf32> to vector<2x5x8xf32>
    %62 = vector.extract_strided_slice %54 {offsets = [0, 0, 24], sizes = [2, 5, 8], strides = [1, 1, 1]} : vector<2x5x32xf32> to vector<2x5x8xf32>
    %63 = tpu.concatenate %59, %60, %61, %62 in 0 : vector<2x5x8xf32>, vector<2x5x8xf32>, vector<2x5x8xf32>, vector<2x5x8xf32> -> vector<8x5x8xf32>
    %64 = vector.extract_strided_slice %56 {offsets = [0, 0, 0], sizes = [2, 5, 8], strides = [1, 1, 1]} : vector<2x5x32xf32> to vector<2x5x8xf32>
    %65 = vector.extract_strided_slice %56 {offsets = [0, 0, 8], sizes = [2, 5, 8], strides = [1, 1, 1]} : vector<2x5x32xf32> to vector<2x5x8xf32>
    %66 = vector.extract_strided_slice %56 {offsets = [0, 0, 16], sizes = [2, 5, 8], strides = [1, 1, 1]} : vector<2x5x32xf32> to vector<2x5x8xf32>
    %67 = vector.extract_strided_slice %56 {offsets = [0, 0, 24], sizes = [2, 5, 8], strides = [1, 1, 1]} : vector<2x5x32xf32> to vector<2x5x8xf32>
    %68 = tpu.concatenate %64, %65, %66, %67 in 0 : vector<2x5x8xf32>, vector<2x5x8xf32>, vector<2x5x8xf32>, vector<2x5x8xf32> -> vector<8x5x8xf32>
    %69 = vector.extract_strided_slice %58 {offsets = [0, 0, 0], sizes = [2, 5, 8], strides = [1, 1, 1]} : vector<2x5x32xf32> to vector<2x5x8xf32>
    %70 = vector.extract_strided_slice %58 {offsets = [0, 0, 8], sizes = [2, 5, 8], strides = [1, 1, 1]} : vector<2x5x32xf32> to vector<2x5x8xf32>
    %71 = vector.extract_strided_slice %58 {offsets = [0, 0, 16], sizes = [2, 5, 8], strides = [1, 1, 1]} : vector<2x5x32xf32> to vector<2x5x8xf32>
    %72 = vector.extract_strided_slice %58 {offsets = [0, 0, 24], sizes = [2, 5, 8], strides = [1, 1, 1]} : vector<2x5x32xf32> to vector<2x5x8xf32>
    %73 = tpu.concatenate %69, %70, %71, %72 in 0 : vector<2x5x8xf32>, vector<2x5x8xf32>, vector<2x5x8xf32>, vector<2x5x8xf32> -> vector<8x5x8xf32>
    %74 = arith.truncf %63 : vector<8x5x8xf32> to vector<8x5x8xbf16>
    %75 = arith.truncf %68 : vector<8x5x8xf32> to vector<8x5x8xbf16>
    %cst_24 = arith.constant dense<0.000000e+00> : vector<8x5x5xf32>
    %76 = tpu.matmul %74, %75, %cst_24 {dimension_numbers = #tpu.dot_dimension_numbers<[2], [2], [1], [1], [0, 0, 0, 1, 1, 1], [0], [0]>} : vector<8x5x8xbf16>, vector<8x5x8xbf16>, vector<8x5x5xf32> -> vector<8x5x5xf32>
    %cst_25 = arith.constant dense<0xFF800000> : vector<8x5xf32>
    %77 = vector.multi_reduction <maximumf>, %76, %cst_25 [2] : vector<8x5x5xf32> to vector<8x5xf32>
    %78 = vector.shape_cast %77 : vector<8x5xf32> to vector<8x5x1xf32>
    %79 = vector.broadcast %78 : vector<8x5x1xf32> to vector<8x5x5xf32>
    %80 = arith.subf %76, %79 : vector<8x5x5xf32>
    %81 = math.exp %80 : vector<8x5x5xf32>
    %cst_26 = arith.constant dense<0.000000e+00> : vector<8x5xf32>
    %82 = vector.multi_reduction <add>, %81, %cst_26 [2] : vector<8x5x5xf32> to vector<8x5xf32>
    %83 = vector.shape_cast %82 : vector<8x5xf32> to vector<8x5x1xf32>
    %84 = tpu.reciprocal %83 {approx = true} : vector<8x5x1xf32> -> vector<8x5x1xf32>
    %85 = vector.broadcast %84 : vector<8x5x1xf32> to vector<8x5x5xf32>
    %86 = arith.mulf %81, %85 : vector<8x5x5xf32>
    %87 = arith.truncf %86 : vector<8x5x5xf32> to vector<8x5x5xbf16>
    %88 = arith.truncf %73 : vector<8x5x8xf32> to vector<8x5x8xbf16>
    %cst_27 = arith.constant dense<0.000000e+00> : vector<8x5x8xf32>
    %89 = tpu.matmul %87, %88, %cst_27 {dimension_numbers = #tpu.dot_dimension_numbers<[2], [1], [1], [2], [0, 0, 0, 1, 1, 2], [0], [0]>} : vector<8x5x5xbf16>, vector<8x5x8xbf16>, vector<8x5x8xf32> -> vector<8x5x8xf32>
    %90 = vector.extract_strided_slice %89 {offsets = [0, 0, 0], sizes = [2, 5, 8], strides = [1, 1, 1]} : vector<8x5x8xf32> to vector<2x5x8xf32>
    %91 = vector.extract_strided_slice %89 {offsets = [2, 0, 0], sizes = [2, 5, 8], strides = [1, 1, 1]} : vector<8x5x8xf32> to vector<2x5x8xf32>
    %92 = vector.extract_strided_slice %89 {offsets = [4, 0, 0], sizes = [2, 5, 8], strides = [1, 1, 1]} : vector<8x5x8xf32> to vector<2x5x8xf32>
    %93 = vector.extract_strided_slice %89 {offsets = [6, 0, 0], sizes = [2, 5, 8], strides = [1, 1, 1]} : vector<8x5x8xf32> to vector<2x5x8xf32>
    %94 = tpu.concatenate %90, %91, %92, %93 in 2 : vector<2x5x8xf32>, vector<2x5x8xf32>, vector<2x5x8xf32>, vector<2x5x8xf32> -> vector<2x5x32xf32>
    %95 = vector.shape_cast %94 : vector<2x5x32xf32> to vector<10x32xf32>
    %96 = arith.truncf %95 : vector<10x32xf32> to vector<10x32xbf16>
    %c0_28 = arith.constant 0 : index
    %c0_29 = arith.constant 0 : index
    %c0_30 = arith.constant 0 : index
    %97 = vector.load %arg6[%c0_28, %c0_29, %c0_30] : memref<2x32x32xbf16, #tpu.memory_space<vmem>>, vector<1x32x32xbf16>
    %98 = vector.shape_cast %97 : vector<1x32x32xbf16> to vector<32x32xbf16>
    %cst_31 = arith.constant dense<0.000000e+00> : vector<10x32xf32>
    %99 = tpu.matmul %96, %98, %cst_31 {dimension_numbers = #tpu.dot_dimension_numbers<[1], [0], [0], [1], [0, 0, 1, 1], [], []>} : vector<10x32xbf16>, vector<32x32xbf16>, vector<10x32xf32> -> vector<10x32xf32>
    %100 = arith.addf %26, %99 : vector<10x32xf32>
    %c0_32 = arith.constant 0 : index
    %c0_33 = arith.constant 0 : index
    %c0_34 = arith.constant 0 : index
    %101 = vector.load %arg7[%c0_32, %c0_33, %c0_34] : memref<2x1x32xf32, #tpu.memory_space<vmem>>, vector<1x1x32xf32>
    %102 = vector.shape_cast %101 : vector<1x1x32xf32> to vector<1x32xf32>
    %103 = vector.broadcast %102 : vector<1x32xf32> to vector<10x32xf32>
    %104 = arith.addf %100, %103 : vector<10x32xf32>
    %cst_35 = arith.constant dense<0.000000e+00> : vector<10xf32>
    %105 = vector.multi_reduction <add>, %104, %cst_35 [1] : vector<10x32xf32> to vector<10xf32>
    %106 = vector.shape_cast %105 : vector<10xf32> to vector<10x1xf32>
    %cst_36 = arith.constant 3.200000e+01 : f32
    %107 = vector.broadcast %cst_36 : f32 to vector<10x1xf32>
    %108 = arith.divf %106, %107 : vector<10x1xf32>
    %109 = vector.broadcast %108 : vector<10x1xf32> to vector<10x32xf32>
    %110 = arith.subf %104, %109 : vector<10x32xf32>
    %111 = arith.mulf %110, %110 : vector<10x32xf32>
    %cst_37 = arith.constant dense<0.000000e+00> : vector<10xf32>
    %112 = vector.multi_reduction <add>, %111, %cst_37 [1] : vector<10x32xf32> to vector<10xf32>
    %113 = vector.shape_cast %112 : vector<10xf32> to vector<10x1xf32>
    %cst_38 = arith.constant 3.200000e+01 : f32
    %114 = vector.broadcast %cst_38 : f32 to vector<10x1xf32>
    %115 = arith.divf %113, %114 : vector<10x1xf32>
    %116 = vector.broadcast %108 : vector<10x1xf32> to vector<10x32xf32>
    %117 = arith.subf %104, %116 : vector<10x32xf32>
    %cst_39 = arith.constant 9.99999974E-6 : f32
    %118 = vector.broadcast %cst_39 : f32 to vector<10x1xf32>
    %119 = arith.addf %115, %118 : vector<10x1xf32>
    %120 = math.rsqrt %119 : vector<10x1xf32>
    %121 = vector.broadcast %120 : vector<10x1xf32> to vector<10x32xf32>
    %122 = arith.mulf %117, %121 : vector<10x32xf32>
    %123 = arith.truncf %122 : vector<10x32xf32> to vector<10x32xbf16>
    %c0_40 = arith.constant 0 : index
    %c0_41 = arith.constant 0 : index
    %c0_42 = arith.constant 0 : index
    %124 = vector.load %arg8[%c0_40, %c0_41, %c0_42] : memref<2x32x64xbf16, #tpu.memory_space<vmem>>, vector<1x32x64xbf16>
    %125 = vector.shape_cast %124 : vector<1x32x64xbf16> to vector<32x64xbf16>
    %cst_43 = arith.constant dense<0.000000e+00> : vector<10x64xf32>
    %126 = tpu.matmul %123, %125, %cst_43 {dimension_numbers = #tpu.dot_dimension_numbers<[1], [0], [0], [1], [0, 0, 1, 1], [], []>} : vector<10x32xbf16>, vector<32x64xbf16>, vector<10x64xf32> -> vector<10x64xf32>
    %c0_44 = arith.constant 0 : index
    %c0_45 = arith.constant 0 : index
    %c0_46 = arith.constant 0 : index
    %127 = vector.load %arg9[%c0_44, %c0_45, %c0_46] : memref<2x1x64xf32, #tpu.memory_space<vmem>>, vector<1x1x64xf32>
    %128 = vector.shape_cast %127 : vector<1x1x64xf32> to vector<1x64xf32>
    %129 = vector.broadcast %128 : vector<1x64xf32> to vector<10x64xf32>
    %130 = arith.addf %126, %129 : vector<10x64xf32>
    %cst_47 = arith.constant 1.702000e+00 : f32
    %131 = vector.broadcast %cst_47 : f32 to vector<10x64xf32>
    %132 = arith.mulf %131, %130 : vector<10x64xf32>
    %133 = arith.negf %132 : vector<10x64xf32>
    %134 = math.exp %133 : vector<10x64xf32>
    %cst_48 = arith.constant 1.000000e+00 : f32
    %135 = vector.broadcast %cst_48 : f32 to vector<10x64xf32>
    %136 = arith.addf %135, %134 : vector<10x64xf32>
    %137 = arith.divf %135, %136 : vector<10x64xf32>
    %138 = arith.mulf %130, %137 : vector<10x64xf32>
    %139 = arith.truncf %138 : vector<10x64xf32> to vector<10x64xbf16>
    %c0_49 = arith.constant 0 : index
    %c0_50 = arith.constant 0 : index
    %c0_51 = arith.constant 0 : index
    %140 = vector.load %arg10[%c0_49, %c0_50, %c0_51] : memref<2x64x32xbf16, #tpu.memory_space<vmem>>, vector<1x64x32xbf16>
    %141 = vector.shape_cast %140 : vector<1x64x32xbf16> to vector<64x32xbf16>
    %cst_52 = arith.constant dense<0.000000e+00> : vector<10x32xf32>
    %142 = tpu.matmul %139, %141, %cst_52 {dimension_numbers = #tpu.dot_dimension_numbers<[1], [0], [0], [1], [0, 0, 1, 1], [], []>} : vector<10x64xbf16>, vector<64x32xbf16>, vector<10x32xf32> -> vector<10x32xf32>
    %143 = arith.addf %104, %142 : vector<10x32xf32>
    %c0_53 = arith.constant 0 : index
    %c0_54 = arith.constant 0 : index
    %c0_55 = arith.constant 0 : index
    %144 = vector.load %arg11[%c0_53, %c0_54, %c0_55] : memref<2x1x32xf32, #tpu.memory_space<vmem>>, vector<1x1x32xf32>
    %145 = vector.shape_cast %144 : vector<1x1x32xf32> to vector<1x32xf32>
    %146 = vector.broadcast %145 : vector<1x32xf32> to vector<10x32xf32>
    %147 = arith.addf %143, %146 : vector<10x32xf32>
    %cst_56 = arith.constant dense<0.000000e+00> : vector<10xf32>
    %148 = vector.multi_reduction <add>, %147, %cst_56 [1] : vector<10x32xf32> to vector<10xf32>
    %149 = vector.shape_cast %148 : vector<10xf32> to vector<10x1xf32>
    %cst_57 = arith.constant 3.200000e+01 : f32
    %150 = vector.broadcast %cst_57 : f32 to vector<10x1xf32>
    %151 = arith.divf %149, %150 : vector<10x1xf32>
    %152 = vector.broadcast %151 : vector<10x1xf32> to vector<10x32xf32>
    %153 = arith.subf %147, %152 : vector<10x32xf32>
    %154 = arith.mulf %153, %153 : vector<10x32xf32>
    %cst_58 = arith.constant dense<0.000000e+00> : vector<10xf32>
    %155 = vector.multi_reduction <add>, %154, %cst_58 [1] : vector<10x32xf32> to vector<10xf32>
    %156 = vector.shape_cast %155 : vector<10xf32> to vector<10x1xf32>
    %cst_59 = arith.constant 3.200000e+01 : f32
    %157 = vector.broadcast %cst_59 : f32 to vector<10x1xf32>
    %158 = arith.divf %156, %157 : vector<10x1xf32>
    %159 = vector.broadcast %151 : vector<10x1xf32> to vector<10x32xf32>
    %160 = arith.subf %147, %159 : vector<10x32xf32>
    %cst_60 = arith.constant 9.99999974E-6 : f32
    %161 = vector.broadcast %cst_60 : f32 to vector<10x1xf32>
    %162 = arith.addf %158, %161 : vector<10x1xf32>
    %163 = math.rsqrt %162 : vector<10x1xf32>
    %164 = vector.broadcast %163 : vector<10x1xf32> to vector<10x32xf32>
    %165 = arith.mulf %160, %164 : vector<10x32xf32>
    %166 = arith.truncf %165 : vector<10x32xf32> to vector<10x32xbf16>
    %c1 = arith.constant 1 : index
    %c0_61 = arith.constant 0 : index
    %c0_62 = arith.constant 0 : index
    %167 = vector.load %arg4[%c1, %c0_61, %c0_62] : memref<2x32x96xbf16, #tpu.memory_space<vmem>>, vector<1x32x96xbf16>
    %168 = vector.shape_cast %167 : vector<1x32x96xbf16> to vector<32x96xbf16>
    %cst_63 = arith.constant dense<0.000000e+00> : vector<10x96xf32>
    %169 = tpu.matmul %166, %168, %cst_63 {dimension_numbers = #tpu.dot_dimension_numbers<[1], [0], [0], [1], [0, 0, 1, 1], [], []>} : vector<10x32xbf16>, vector<32x96xbf16>, vector<10x96xf32> -> vector<10x96xf32>
    %c1_64 = arith.constant 1 : index
    %c0_65 = arith.constant 0 : index
    %c0_66 = arith.constant 0 : index
    %170 = vector.load %arg5[%c1_64, %c0_65, %c0_66] : memref<2x1x96xf32, #tpu.memory_space<vmem>>, vector<1x1x96xf32>
    %171 = vector.shape_cast %170 : vector<1x1x96xf32> to vector<1x96xf32>
    %172 = vector.broadcast %171 : vector<1x96xf32> to vector<10x96xf32>
    %173 = arith.addf %169, %172 : vector<10x96xf32>
    %174 = vector.extract_strided_slice %173 {offsets = [0, 0], sizes = [10, 32], strides = [1, 1]} : vector<10x96xf32> to vector<10x32xf32>
    %175 = vector.shape_cast %174 : vector<10x32xf32> to vector<2x5x32xf32>
    %176 = vector.extract_strided_slice %173 {offsets = [0, 32], sizes = [10, 32], strides = [1, 1]} : vector<10x96xf32> to vector<10x32xf32>
    %177 = vector.shape_cast %176 : vector<10x32xf32> to vector<2x5x32xf32>
    %178 = vector.extract_strided_slice %173 {offsets = [0, 64], sizes = [10, 32], strides = [1, 1]} : vector<10x96xf32> to vector<10x32xf32>
    %179 = vector.shape_cast %178 : vector<10x32xf32> to vector<2x5x32xf32>
    %180 = vector.extract_strided_slice %175 {offsets = [0, 0, 0], sizes = [2, 5, 8], strides = [1, 1, 1]} : vector<2x5x32xf32> to vector<2x5x8xf32>
    %181 = vector.extract_strided_slice %175 {offsets = [0, 0, 8], sizes = [2, 5, 8], strides = [1, 1, 1]} : vector<2x5x32xf32> to vector<2x5x8xf32>
    %182 = vector.extract_strided_slice %175 {offsets = [0, 0, 16], sizes = [2, 5, 8], strides = [1, 1, 1]} : vector<2x5x32xf32> to vector<2x5x8xf32>
    %183 = vector.extract_strided_slice %175 {offsets = [0, 0, 24], sizes = [2, 5, 8], strides = [1, 1, 1]} : vector<2x5x32xf32> to vector<2x5x8xf32>
    %184 = tpu.concatenate %180, %181, %182, %183 in 0 : vector<2x5x8xf32>, vector<2x5x8xf32>, vector<2x5x8xf32>, vector<2x5x8xf32> -> vector<8x5x8xf32>
    %185 = vector.extract_strided_slice %177 {offsets = [0, 0, 0], sizes = [2, 5, 8], strides = [1, 1, 1]} : vector<2x5x32xf32> to vector<2x5x8xf32>
    %186 = vector.extract_strided_slice %177 {offsets = [0, 0, 8], sizes = [2, 5, 8], strides = [1, 1, 1]} : vector<2x5x32xf32> to vector<2x5x8xf32>
    %187 = vector.extract_strided_slice %177 {offsets = [0, 0, 16], sizes = [2, 5, 8], strides = [1, 1, 1]} : vector<2x5x32xf32> to vector<2x5x8xf32>
    %188 = vector.extract_strided_slice %177 {offsets = [0, 0, 24], sizes = [2, 5, 8], strides = [1, 1, 1]} : vector<2x5x32xf32> to vector<2x5x8xf32>
    %189 = tpu.concatenate %185, %186, %187, %188 in 0 : vector<2x5x8xf32>, vector<2x5x8xf32>, vector<2x5x8xf32>, vector<2x5x8xf32> -> vector<8x5x8xf32>
    %190 = vector.extract_strided_slice %179 {offsets = [0, 0, 0], sizes = [2, 5, 8], strides = [1, 1, 1]} : vector<2x5x32xf32> to vector<2x5x8xf32>
    %191 = vector.extract_strided_slice %179 {offsets = [0, 0, 8], sizes = [2, 5, 8], strides = [1, 1, 1]} : vector<2x5x32xf32> to vector<2x5x8xf32>
    %192 = vector.extract_strided_slice %179 {offsets = [0, 0, 16], sizes = [2, 5, 8], strides = [1, 1, 1]} : vector<2x5x32xf32> to vector<2x5x8xf32>
    %193 = vector.extract_strided_slice %179 {offsets = [0, 0, 24], sizes = [2, 5, 8], strides = [1, 1, 1]} : vector<2x5x32xf32> to vector<2x5x8xf32>
    %194 = tpu.concatenate %190, %191, %192, %193 in 0 : vector<2x5x8xf32>, vector<2x5x8xf32>, vector<2x5x8xf32>, vector<2x5x8xf32> -> vector<8x5x8xf32>
    %195 = arith.truncf %184 : vector<8x5x8xf32> to vector<8x5x8xbf16>
    %196 = arith.truncf %189 : vector<8x5x8xf32> to vector<8x5x8xbf16>
    %cst_67 = arith.constant dense<0.000000e+00> : vector<8x5x5xf32>
    %197 = tpu.matmul %195, %196, %cst_67 {dimension_numbers = #tpu.dot_dimension_numbers<[2], [2], [1], [1], [0, 0, 0, 1, 1, 1], [0], [0]>} : vector<8x5x8xbf16>, vector<8x5x8xbf16>, vector<8x5x5xf32> -> vector<8x5x5xf32>
    %cst_68 = arith.constant dense<0xFF800000> : vector<8x5xf32>
    %198 = vector.multi_reduction <maximumf>, %197, %cst_68 [2] : vector<8x5x5xf32> to vector<8x5xf32>
    %199 = vector.shape_cast %198 : vector<8x5xf32> to vector<8x5x1xf32>
    %200 = vector.broadcast %199 : vector<8x5x1xf32> to vector<8x5x5xf32>
    %201 = arith.subf %197, %200 : vector<8x5x5xf32>
    %202 = math.exp %201 : vector<8x5x5xf32>
    %cst_69 = arith.constant dense<0.000000e+00> : vector<8x5xf32>
    %203 = vector.multi_reduction <add>, %202, %cst_69 [2] : vector<8x5x5xf32> to vector<8x5xf32>
    %204 = vector.shape_cast %203 : vector<8x5xf32> to vector<8x5x1xf32>
    %205 = tpu.reciprocal %204 {approx = true} : vector<8x5x1xf32> -> vector<8x5x1xf32>
    %206 = vector.broadcast %205 : vector<8x5x1xf32> to vector<8x5x5xf32>
    %207 = arith.mulf %202, %206 : vector<8x5x5xf32>
    %208 = arith.truncf %207 : vector<8x5x5xf32> to vector<8x5x5xbf16>
    %209 = arith.truncf %194 : vector<8x5x8xf32> to vector<8x5x8xbf16>
    %cst_70 = arith.constant dense<0.000000e+00> : vector<8x5x8xf32>
    %210 = tpu.matmul %208, %209, %cst_70 {dimension_numbers = #tpu.dot_dimension_numbers<[2], [1], [1], [2], [0, 0, 0, 1, 1, 2], [0], [0]>} : vector<8x5x5xbf16>, vector<8x5x8xbf16>, vector<8x5x8xf32> -> vector<8x5x8xf32>
    %211 = vector.extract_strided_slice %210 {offsets = [0, 0, 0], sizes = [2, 5, 8], strides = [1, 1, 1]} : vector<8x5x8xf32> to vector<2x5x8xf32>
    %212 = vector.extract_strided_slice %210 {offsets = [2, 0, 0], sizes = [2, 5, 8], strides = [1, 1, 1]} : vector<8x5x8xf32> to vector<2x5x8xf32>
    %213 = vector.extract_strided_slice %210 {offsets = [4, 0, 0], sizes = [2, 5, 8], strides = [1, 1, 1]} : vector<8x5x8xf32> to vector<2x5x8xf32>
    %214 = vector.extract_strided_slice %210 {offsets = [6, 0, 0], sizes = [2, 5, 8], strides = [1, 1, 1]} : vector<8x5x8xf32> to vector<2x5x8xf32>
    %215 = tpu.concatenate %211, %212, %213, %214 in 2 : vector<2x5x8xf32>, vector<2x5x8xf32>, vector<2x5x8xf32>, vector<2x5x8xf32> -> vector<2x5x32xf32>
    %216 = vector.shape_cast %215 : vector<2x5x32xf32> to vector<10x32xf32>
    %217 = arith.truncf %216 : vector<10x32xf32> to vector<10x32xbf16>
    %c1_71 = arith.constant 1 : index
    %c0_72 = arith.constant 0 : index
    %c0_73 = arith.constant 0 : index
    %218 = vector.load %arg6[%c1_71, %c0_72, %c0_73] : memref<2x32x32xbf16, #tpu.memory_space<vmem>>, vector<1x32x32xbf16>
    %219 = vector.shape_cast %218 : vector<1x32x32xbf16> to vector<32x32xbf16>
    %cst_74 = arith.constant dense<0.000000e+00> : vector<10x32xf32>
    %220 = tpu.matmul %217, %219, %cst_74 {dimension_numbers = #tpu.dot_dimension_numbers<[1], [0], [0], [1], [0, 0, 1, 1], [], []>} : vector<10x32xbf16>, vector<32x32xbf16>, vector<10x32xf32> -> vector<10x32xf32>
    %221 = arith.addf %147, %220 : vector<10x32xf32>
    %c1_75 = arith.constant 1 : index
    %c0_76 = arith.constant 0 : index
    %c0_77 = arith.constant 0 : index
    %222 = vector.load %arg7[%c1_75, %c0_76, %c0_77] : memref<2x1x32xf32, #tpu.memory_space<vmem>>, vector<1x1x32xf32>
    %223 = vector.shape_cast %222 : vector<1x1x32xf32> to vector<1x32xf32>
    %224 = vector.broadcast %223 : vector<1x32xf32> to vector<10x32xf32>
    %225 = arith.addf %221, %224 : vector<10x32xf32>
    %cst_78 = arith.constant dense<0.000000e+00> : vector<10xf32>
    %226 = vector.multi_reduction <add>, %225, %cst_78 [1] : vector<10x32xf32> to vector<10xf32>
    %227 = vector.shape_cast %226 : vector<10xf32> to vector<10x1xf32>
    %cst_79 = arith.constant 3.200000e+01 : f32
    %228 = vector.broadcast %cst_79 : f32 to vector<10x1xf32>
    %229 = arith.divf %227, %228 : vector<10x1xf32>
    %230 = vector.broadcast %229 : vector<10x1xf32> to vector<10x32xf32>
    %231 = arith.subf %225, %230 : vector<10x32xf32>
    %232 = arith.mulf %231, %231 : vector<10x32xf32>
    %cst_80 = arith.constant dense<0.000000e+00> : vector<10xf32>
    %233 = vector.multi_reduction <add>, %232, %cst_80 [1] : vector<10x32xf32> to vector<10xf32>
    %234 = vector.shape_cast %233 : vector<10xf32> to vector<10x1xf32>
    %cst_81 = arith.constant 3.200000e+01 : f32
    %235 = vector.broadcast %cst_81 : f32 to vector<10x1xf32>
    %236 = arith.divf %234, %235 : vector<10x1xf32>
    %237 = vector.broadcast %229 : vector<10x1xf32> to vector<10x32xf32>
    %238 = arith.subf %225, %237 : vector<10x32xf32>
    %cst_82 = arith.constant 9.99999974E-6 : f32
    %239 = vector.broadcast %cst_82 : f32 to vector<10x1xf32>
    %240 = arith.addf %236, %239 : vector<10x1xf32>
    %241 = math.rsqrt %240 : vector<10x1xf32>
    %242 = vector.broadcast %241 : vector<10x1xf32> to vector<10x32xf32>
    %243 = arith.mulf %238, %242 : vector<10x32xf32>
    %244 = arith.truncf %243 : vector<10x32xf32> to vector<10x32xbf16>
    %c1_83 = arith.constant 1 : index
    %c0_84 = arith.constant 0 : index
    %c0_85 = arith.constant 0 : index
    %245 = vector.load %arg8[%c1_83, %c0_84, %c0_85] : memref<2x32x64xbf16, #tpu.memory_space<vmem>>, vector<1x32x64xbf16>
    %246 = vector.shape_cast %245 : vector<1x32x64xbf16> to vector<32x64xbf16>
    %cst_86 = arith.constant dense<0.000000e+00> : vector<10x64xf32>
    %247 = tpu.matmul %244, %246, %cst_86 {dimension_numbers = #tpu.dot_dimension_numbers<[1], [0], [0], [1], [0, 0, 1, 1], [], []>} : vector<10x32xbf16>, vector<32x64xbf16>, vector<10x64xf32> -> vector<10x64xf32>
    %c1_87 = arith.constant 1 : index
    %c0_88 = arith.constant 0 : index
    %c0_89 = arith.constant 0 : index
    %248 = vector.load %arg9[%c1_87, %c0_88, %c0_89] : memref<2x1x64xf32, #tpu.memory_space<vmem>>, vector<1x1x64xf32>
    %249 = vector.shape_cast %248 : vector<1x1x64xf32> to vector<1x64xf32>
    %250 = vector.broadcast %249 : vector<1x64xf32> to vector<10x64xf32>
    %251 = arith.addf %247, %250 : vector<10x64xf32>
    %cst_90 = arith.constant 1.702000e+00 : f32
    %252 = vector.broadcast %cst_90 : f32 to vector<10x64xf32>
    %253 = arith.mulf %252, %251 : vector<10x64xf32>
    %254 = arith.negf %253 : vector<10x64xf32>
    %255 = math.exp %254 : vector<10x64xf32>
    %cst_91 = arith.constant 1.000000e+00 : f32
    %256 = vector.broadcast %cst_91 : f32 to vector<10x64xf32>
    %257 = arith.addf %256, %255 : vector<10x64xf32>
    %258 = arith.divf %256, %257 : vector<10x64xf32>
    %259 = arith.mulf %251, %258 : vector<10x64xf32>
    %260 = arith.truncf %259 : vector<10x64xf32> to vector<10x64xbf16>
    %c1_92 = arith.constant 1 : index
    %c0_93 = arith.constant 0 : index
    %c0_94 = arith.constant 0 : index
    %261 = vector.load %arg10[%c1_92, %c0_93, %c0_94] : memref<2x64x32xbf16, #tpu.memory_space<vmem>>, vector<1x64x32xbf16>
    %262 = vector.shape_cast %261 : vector<1x64x32xbf16> to vector<64x32xbf16>
    %cst_95 = arith.constant dense<0.000000e+00> : vector<10x32xf32>
    %263 = tpu.matmul %260, %262, %cst_95 {dimension_numbers = #tpu.dot_dimension_numbers<[1], [0], [0], [1], [0, 0, 1, 1], [], []>} : vector<10x64xbf16>, vector<64x32xbf16>, vector<10x32xf32> -> vector<10x32xf32>
    %264 = arith.addf %225, %263 : vector<10x32xf32>
    %c1_96 = arith.constant 1 : index
    %c0_97 = arith.constant 0 : index
    %c0_98 = arith.constant 0 : index
    %265 = vector.load %arg11[%c1_96, %c0_97, %c0_98] : memref<2x1x32xf32, #tpu.memory_space<vmem>>, vector<1x1x32xf32>
    %266 = vector.shape_cast %265 : vector<1x1x32xf32> to vector<1x32xf32>
    %267 = vector.broadcast %266 : vector<1x32xf32> to vector<10x32xf32>
    %268 = arith.addf %264, %267 : vector<10x32xf32>
    %269 = vector.shape_cast %268 : vector<10x32xf32> to vector<2x5x32xf32>
    %270 = vector.extract_strided_slice %269 {offsets = [0, 1, 0], sizes = [2, 4, 32], strides = [1, 1, 1]} : vector<2x5x32xf32> to vector<2x4x32xf32>
    %c0_99 = arith.constant 0 : index
    %c0_100 = arith.constant 0 : index
    %c0_101 = arith.constant 0 : index
    %271 = vector.load %arg12[%c0_99, %c0_100, %c0_101] : memref<2x4x32xf32, #tpu.memory_space<vmem>>, vector<2x4x32xf32>
    tpu.vector_store %arg12[%c0_99, %c0_100, %c0_101], %270 {strides = array<i32>} : memref<2x4x32xf32, #tpu.memory_space<vmem>>, vector<2x4x32xf32>,
    return
  }
}

</mosaic_0001>

<llo_original>
// kernel: tpu_custom_call.1
$region0: #{tpu_custom_call.1}
  #allocation0 [shape = 'u32[]', space=smem, size = 0x4, offset = 0x4, fixed_abs, tag = 'smem constant byte address 0x4 - core index']
  #allocation1 [shape = 'u32[72,128]{1,0:T(1,128)}', space=vmem, size = 0x9000, scoped, tag = 'internal scratch']
  %s0 = inlined_call_operand.vmem [shape: f32[10,197], index: 0, kind: input, shape index: {}]
  %s1 = inlined_call_operand.vmem [shape: f32[197,32], index: 1, kind: input, shape index: {}]
  %s2 = inlined_call_operand.vmem [shape: f32[1,32], index: 2, kind: input, shape index: {}]
  %s3 = inlined_call_operand.vmem [shape: f32[1,32], index: 3, kind: input, shape index: {}]
  %s4 = inlined_call_operand.vmem [shape: bf16[2,32,96], index: 4, kind: input, shape index: {}]
  %s5 = inlined_call_operand.vmem [shape: f32[2,1,96], index: 5, kind: input, shape index: {}]
  %s6 = inlined_call_operand.vmem [shape: bf16[2,32,32], index: 6, kind: input, shape index: {}]
  %s7 = inlined_call_operand.vmem [shape: f32[2,1,32], index: 7, kind: input, shape index: {}]
  %s8 = inlined_call_operand.vmem [shape: bf16[2,32,64], index: 8, kind: input, shape index: {}]
  %s9 = inlined_call_operand.vmem [shape: f32[2,1,64], index: 9, kind: input, shape index: {}]
  %s10 = inlined_call_operand.vmem [shape: bf16[2,64,32], index: 10, kind: input, shape index: {}]
  %s11 = inlined_call_operand.vmem [shape: f32[2,1,32], index: 11, kind: input, shape index: {}]
  %s12 = inlined_call_operand.hbm [shape: f32[2,4,32], index: 12, kind: output, shape index: {}]
  %s13 = sld [smem:[#allocation0]]
  $region58: #{tpu_custom_call.1} parent=0
    _
  %s15 = ssub.s32 1, %s13
  %s16 = scalar_select 0, %s15, %s13
  $region1: #{tpu_custom_call.1} parent=0
    #allocation2 [shape = 'u8[4096]{0}', space=vmem, size = 0x1000, scoped, tag = 'output window, operand 0, single buffered']
    #allocation3 [shape = 's32[1]{0}', space=sflag, size = 0x4, scoped, tag = 'scoped memory for tpu_custom_call.1']
    %17 = vsyncpa [#allocation3], 0
    // Predicated region
    $region2: #{tpu_custom_call.1} parent=1 // pred_check
      _
    $region3: #{tpu_custom_call.1} parent=1 // pred_check_branch
      %19 = sbr.rel (0) target = $region5
    $region4: #{tpu_custom_call.1} parent=1 // pred_region
      _
    $region5: #{tpu_custom_call.1} parent=1 // pred_fallthru
      _
    // Predicated region
    $region6: #{tpu_custom_call.1} parent=1 // pred_check
      _
    $region7: #{tpu_custom_call.1} parent=1 // pred_check_branch
      %21 = sbr.rel (0) target = $region9
    $region8: #{tpu_custom_call.1} parent=1 // pred_region
      _
    $region9: #{tpu_custom_call.1} parent=1 // pred_fallthru
      _
    // Predicated region
    $region10: #{tpu_custom_call.1} parent=1 // pred_check
      _
    $region11: #{tpu_custom_call.1} parent=1 // pred_check_branch
      %23 = sbr.rel (0) target = $region13
    $region12: #{tpu_custom_call.1} parent=1 // pred_region
      _
    $region13: #{tpu_custom_call.1} parent=1 // pred_fallthru
      _
    // Predicated region
    $region14: #{tpu_custom_call.1} parent=1 // pred_check
      _
    $region15: #{tpu_custom_call.1} parent=1 // pred_check_branch
      %25 = sbr.rel (0) target = $region17
    $region16: #{tpu_custom_call.1} parent=1 // pred_region
      _
    $region17: #{tpu_custom_call.1} parent=1 // pred_fallthru
      _
    // Predicated region
    $region18: #{tpu_custom_call.1} parent=1 // pred_check
      _
    $region19: #{tpu_custom_call.1} parent=1 // pred_check_branch
      %27 = sbr.rel (0) target = $region21
    $region20: #{tpu_custom_call.1} parent=1 // pred_region
      _
    $region21: #{tpu_custom_call.1} parent=1 // pred_fallthru
      _
    // Predicated region
    $region22: #{tpu_custom_call.1} parent=1 // pred_check
      _
    $region23: #{tpu_custom_call.1} parent=1 // pred_check_branch
      %29 = sbr.rel (0) target = $region25
    $region24: #{tpu_custom_call.1} parent=1 // pred_region
      _
    $region25: #{tpu_custom_call.1} parent=1 // pred_fallthru
      _
    // Predicated region
    $region26: #{tpu_custom_call.1} parent=1 // pred_check
      _
    $region27: #{tpu_custom_call.1} parent=1 // pred_check_branch
      %31 = sbr.rel (0) target = $region29
    $region28: #{tpu_custom_call.1} parent=1 // pred_region
      _
    $region29: #{tpu_custom_call.1} parent=1 // pred_fallthru
      _
    // Predicated region
    $region30: #{tpu_custom_call.1} parent=1 // pred_check
      _
    $region31: #{tpu_custom_call.1} parent=1 // pred_check_branch
      %33 = sbr.rel (0) target = $region33
    $region32: #{tpu_custom_call.1} parent=1 // pred_region
      _
    $region33: #{tpu_custom_call.1} parent=1 // pred_fallthru
      _
    // Predicated region
    $region34: #{tpu_custom_call.1} parent=1 // pred_check
      _
    $region35: #{tpu_custom_call.1} parent=1 // pred_check_branch
      %35 = sbr.rel (0) target = $region37
    $region36: #{tpu_custom_call.1} parent=1 // pred_region
      _
    $region37: #{tpu_custom_call.1} parent=1 // pred_fallthru
      _
    // Predicated region
    $region38: #{tpu_custom_call.1} parent=1 // pred_check
      _
    $region39: #{tpu_custom_call.1} parent=1 // pred_check_branch
      %37 = sbr.rel (0) target = $region41
    $region40: #{tpu_custom_call.1} parent=1 // pred_region
      _
    $region41: #{tpu_custom_call.1} parent=1 // pred_fallthru
      _
    // Predicated region
    $region42: #{tpu_custom_call.1} parent=1 // pred_check
      _
    $region43: #{tpu_custom_call.1} parent=1 // pred_check_branch
      %39 = sbr.rel (0) target = $region45
    $region44: #{tpu_custom_call.1} parent=1 // pred_region
      _
    $region45: #{tpu_custom_call.1} parent=1 // pred_fallthru
      _
    // Predicated region
    $region46: #{tpu_custom_call.1} parent=1 // pred_check
      _
    $region47: #{tpu_custom_call.1} parent=1 // pred_check_branch
      %41 = sbr.rel (0) target = $region49
    $region48: #{tpu_custom_call.1} parent=1 // pred_region
      _
    $region49: #{tpu_custom_call.1} parent=1 // pred_fallthru
      _
    %v43 = vld [vmem:[%s0] sm:$0xff]
    %v44 = vld [vmem:[%s0 + $0x8] sm:$0xff]
    %v45 = vld [vmem:[%s0 + $0x10] sm:$0x3]
    %v46 = vld [vmem:[%s0 + $0x18] sm:$0x3]
    %v47 = vld [vmem:[%s1] sm:$0xff]
    %v48 = vld [vmem:[%s1 + $0x8] sm:$0xff]
    %v49 = vld [vmem:[%s1 + $0x10] sm:$0xff]
    %v50 = vld [vmem:[%s1 + $0x18] sm:$0xff]
    %v51 = vld [vmem:[%s1 + $0x20] sm:$0xff]
    %v52 = vld [vmem:[%s1 + $0x28] sm:$0xff]
    %v53 = vld [vmem:[%s1 + $0x30] sm:$0xff]
    %v54 = vld [vmem:[%s1 + $0x38] sm:$0xff]
    %v55 = vld [vmem:[%s1 + $0x40] sm:$0xff]
    %v56 = vld [vmem:[%s1 + $0x48] sm:$0xff]
    %v57 = vld [vmem:[%s1 + $0x50] sm:$0xff]
    %v58 = vld [vmem:[%s1 + $0x58] sm:$0xff]
    %v59 = vld [vmem:[%s1 + $0x60] sm:$0xff]
    %v60 = vld [vmem:[%s1 + $0x68] sm:$0xff]
    %v61 = vld [vmem:[%s1 + $0x70] sm:$0xff]
    %v62 = vld [vmem:[%s1 + $0x78] sm:$0xff]
    %v63 = vld [vmem:[%s1 + $0x80] sm:$0xff]
    %v64 = vld [vmem:[%s1 + $0x88] sm:$0xff]
    %v65 = vld [vmem:[%s1 + $0x90] sm:$0xff]
    %v66 = vld [vmem:[%s1 + $0x98] sm:$0xff]
    %v67 = vld [vmem:[%s1 + $0xa0] sm:$0xff]
    %v68 = vld [vmem:[%s1 + $0xa8] sm:$0xff]
    %v69 = vld [vmem:[%s1 + $0xb0] sm:$0xff]
    %v70 = vld [vmem:[%s1 + $0xb8] sm:$0xff]
    %v71 = vld [vmem:[%s1 + $0xc0] sm:$0x1f]
    %vm72 = vcmask 564224
    %v74 = vsel %vm72, %v44, 0
    %v77 = vsel %vm72, %v46, 0
    %vm79 = vcmask 1044480
    %v81 = vsel %vm79, %v71, 0
    %83 = vmatpush.msra.mxu0 %v62
    %84 = vmatpush.msra.mxu0 %v61
    %85 = vmatpush.msra.mxu0 %v60
    %86 = vmatpush.msra.mxu0 %v59
    %87 = vmatpush.msra.mxu0 %v58
    %88 = vmatpush.msra.mxu0 %v57
    %89 = vmatpush.msra.mxu0 %v56
    %90 = vmatpush.msra.mxu0 %v55
    %91 = vmatpush.msra.mxu0 %v54
    %92 = vmatpush.msra.mxu0 %v53
    %93 = vmatpush.msra.mxu0 %v52
    %94 = vmatpush.msra.mxu0 %v51
    %95 = vmatpush.msra.mxu0 %v50
    %96 = vmatpush.msra.mxu0 %v49
    %97 = vmatpush.msra.mxu0 %v48
    %98 = vmatpush.msra.mxu0 %v47
    %99 = vmatmul.f32.gmra.mxu0 %v43
    %v100 = vpop.f32.mrf.mxu0
    %v101 = vadd.f32 0.0, %v100
    %102 = vmatmul.f32.gmra.mxu0 %v45
    %v103 = vpop.f32.mrf.mxu0
    %v104 = vadd.f32 0.0, %v103
    %105 = vdwg.mxu0
    %106 = vmatpush.msra.mxu0 0.0
    %107 = vmatpush.msra.mxu0 0.0
    %108 = vmatpush.msra.mxu0 0.0
    %109 = vmatpush.msra.mxu0 0.0
    %110 = vmatpush.msra.mxu0 0.0
    %111 = vmatpush.msra.mxu0 0.0
    %112 = vmatpush.msra.mxu0 0.0
    %113 = vmatpush.msra.mxu0 %v81
    %114 = vmatpush.msra.mxu0 %v70
    %115 = vmatpush.msra.mxu0 %v69
    %116 = vmatpush.msra.mxu0 %v68
    %117 = vmatpush.msra.mxu0 %v67
    %118 = vmatpush.msra.mxu0 %v66
    %119 = vmatpush.msra.mxu0 %v65
    %120 = vmatpush.msra.mxu0 %v64
    %121 = vmatpush.msra.mxu0 %v63
    %122 = vmatmul.f32.gmra.mxu0 %v74
    %v123 = vpop.f32.mrf.mxu0
    %v124 = vadd.f32 %v101, %v123
    %125 = vmatmul.f32.gmra.mxu0 %v77
    %v126 = vpop.f32.mrf.mxu0
    %v127 = vadd.f32 %v104, %v126
    %128 = vdwg.mxu0
    %vm129 = vcmask 261120
    %v130 = vsel %vm129, %v124, 0.0
    %131 = vadd.xlane.f32.xlu0 %v130
    %v132 = vpop.xlane.xlu0 %131
    %vm133 = vcmask 254976
    %v134 = vsel %vm133, %v127, 0.0
    %135 = vadd.xlane.f32.xlu0 %v134
    %v136 = vpop.xlane.xlu0 %135
    %v137 = vrcp.pop 32.0
    %v138 = vmul.f32 32.0, %v137
    %v139 = vsub.f32 1.0, %v138
    %v140 = vmul.f32 %v137, %v139
    %v141 = vadd.f32 %v137, %v140
    %vm142 = vweird.f32 %v137
    %v143 = vsel %vm142, %v137, %v141
    %v144 = vmul.f32 %v132, %v143
    %v145 = vmul.f32 %v136, %v143
    %v146 = vsub.f32 %v124, %v144
    %v147 = vsub.f32 %v127, %v145
    %v148 = vmul.f32 %v146, %v146
    %v149 = vmul.f32 %v147, %v147
    %v150 = vsel %vm129, %v148, 0.0
    %151 = vadd.xlane.f32.xlu0 %v150
    %v152 = vpop.xlane.xlu0 %151
    %v153 = vsel %vm133, %v149, 0.0
    %154 = vadd.xlane.f32.xlu0 %v153
    %v155 = vpop.xlane.xlu0 %154
    %v156 = vmul.f32 %v152, %v143
    %v157 = vmul.f32 %v155, %v143
    %v158 = vadd.f32 %v156, 1e-05
    %v159 = vadd.f32 %v157, 1e-05
    %v160 = vrsqrt.pop %v158
    %v161 = vmul.f32 %v160, %v158
    %v162 = vmul.f32 %v161, %v160
    %v163 = vmul.f32 0.5, %v162
    %v164 = vsub.f32 1.5, %v163
    %v165 = vmul.f32 %v160, %v164
    %vm166 = vweird.f32 %v158
    %vm167 = vweird.f32 %v160
    %vm168 = vmor %vm166, %vm167
    %v169 = vsel %vm168, %v160, %v165
    %v170 = vrsqrt.pop %v159
    %v171 = vmul.f32 %v170, %v159
    %v172 = vmul.f32 %v171, %v170
    %v173 = vmul.f32 0.5, %v172
    %v174 = vsub.f32 1.5, %v173
    %v175 = vmul.f32 %v170, %v174
    %vm176 = vweird.f32 %v159
    %vm177 = vweird.f32 %v170
    %vm178 = vmor %vm176, %vm177
    %v179 = vsel %vm178, %v170, %v175
    %v180 = vmul.f32 %v146, %v169
    %v181 = vmul.f32 %v147, %v179
    %v182 = vld [vmem:[%s2] sm:$0x1]
    %v184 = vperm.slane %v182, 0
    %v186 = vmul.f32 %v180, %v184
    %v187 = vmul.f32 %v181, %v184
    %v188 = vld [vmem:[%s3] sm:$0x1]
    %v190 = vperm.slane %v188, 0
    %v192 = vadd.f32 %v186, %v190
    %v193 = vadd.f32 %v187, %v190
    %v194 = vsel %vm129, %v192, 0.0
    %195 = vadd.xlane.f32.xlu0 %v194
    %v196 = vpop.xlane.xlu0 %195
    %v197 = vsel %vm133, %v193, 0.0
    %198 = vadd.xlane.f32.xlu0 %v197
    %v199 = vpop.xlane.xlu0 %198
    %v200 = vmul.f32 %v196, %v143
    %v201 = vmul.f32 %v199, %v143
    %v202 = vsub.f32 %v192, %v200
    %v203 = vsub.f32 %v193, %v201
    %v204 = vmul.f32 %v202, %v202
    %v205 = vmul.f32 %v203, %v203
    %v206 = vsel %vm129, %v204, 0.0
    %207 = vadd.xlane.f32.xlu0 %v206
    %v208 = vpop.xlane.xlu0 %207
    %v209 = vsel %vm133, %v205, 0.0
    %210 = vadd.xlane.f32.xlu0 %v209
    %v211 = vpop.xlane.xlu0 %210
    %v212 = vmul.f32 %v208, %v143
    %v213 = vmul.f32 %v211, %v143
    %v214 = vadd.f32 %v212, 1e-05
    %v215 = vadd.f32 %v213, 1e-05
    %v216 = vrsqrt.pop %v214
    %v217 = vmul.f32 %v216, %v214
    %v218 = vmul.f32 %v217, %v216
    %v219 = vmul.f32 0.5, %v218
    %v220 = vsub.f32 1.5, %v219
    %v221 = vmul.f32 %v216, %v220
    %vm222 = vweird.f32 %v214
    %vm223 = vweird.f32 %v216
    %vm224 = vmor %vm222, %vm223
    %v225 = vsel %vm224, %v216, %v221
    %v226 = vrsqrt.pop %v215
    %v227 = vmul.f32 %v226, %v215
    %v228 = vmul.f32 %v227, %v226
    %v229 = vmul.f32 0.5, %v228
    %v230 = vsub.f32 1.5, %v229
    %v231 = vmul.f32 %v226, %v230
    %vm232 = vweird.f32 %v215
    %vm233 = vweird.f32 %v226
    %vm234 = vmor %vm232, %vm233
    %v235 = vsel %vm234, %v226, %v231
    %v236 = vmul.f32 %v202, %v225
    %v237 = vmul.f32 %v203, %v235
    %v238 = vpack.c.bf16 %v237, %v236
    %v239 = vld [vmem:[%s4] sm:$0xf]
    %v240 = vld [vmem:[%s4 + $0x4] sm:$0xf]
    %v241 = vld [vmem:[%s4 + $0x8] sm:$0xf]
    %v242 = vld [vmem:[%s4 + $0xc] sm:$0xf]
    %v243 = vld [vmem:[%s5] sm:$0x1]
    %v245 = vperm.slane %v243, 0
    %v251 = vunpack.c.l.b16 %v239
    %v252 = vunpack.c.l.b16 %v240
    %v253 = vunpack.c.l.b16 %v241
    %v254 = vunpack.c.l.b16 %v242
    %v255 = vpack.c.b16 %v252, %v251
    %v256 = vpack.c.b16 %v254, %v253
    %v260 = vsel %vm129, %v238, 0
    %262 = vmatpush.bf16.msra.mxu0 0
    %263 = vmatpush.bf16.msra.mxu0 0
    %264 = vmatpush.bf16.msra.mxu0 0
    %265 = vmatpush.bf16.msra.mxu0 0
    %266 = vmatpush.bf16.msra.mxu0 0
    %267 = vmatpush.bf16.msra.mxu0 0
    %268 = vmatpush.bf16.msra.mxu0 %v256
    %269 = vmatpush.bf16.msra.mxu0 %v255
    %270 = vmatmul.bf16.gmra.mxu0 %v260
    %v271 = vpop.f32.mrf.mxu0
    %v272 = vadd.f32 %v245, %v271
    %v273 = vpop.f32.mrf.mxu0
    %v274 = vadd.f32 %v245, %v273
    %275 = vdwg.mxu0
    %v278 = vrot.slane %v272, 1
    %v279 = vrot.slane %v272, 2
    %v280 = vrot.slane %v272, 3
    %v281 = vrot.slane %v272, 4
    %v282 = vrot.slane %v272, 5
    %v283 = vrot.slane %v272, 6
    %v284 = vrot.slane %v272, 7
    %v285 = vrot.slane %v274, 1
    %286 = vrot.lane.b32.xlu0 %v272, 120
    %v287 = vpop.permute.xlu0 %286
    %288 = vrot.lane.b32.xlu0 %v278, 120
    %v289 = vpop.permute.xlu0 %288
    %290 = vrot.lane.b32.xlu0 %v279, 120
    %v291 = vpop.permute.xlu0 %290
    %292 = vrot.lane.b32.xlu0 %v280, 120
    %v293 = vpop.permute.xlu0 %292
    %294 = vrot.lane.b32.xlu0 %v281, 120
    %v295 = vpop.permute.xlu0 %294
    %296 = vrot.lane.b32.xlu0 %v282, 120
    %v297 = vpop.permute.xlu0 %296
    %298 = vrot.lane.b32.xlu0 %v283, 120
    %v299 = vpop.permute.xlu0 %298
    %300 = vrot.lane.b32.xlu0 %v284, 120
    %v301 = vpop.permute.xlu0 %300
    %302 = vrot.lane.b32.xlu0 %v274, 120
    %v303 = vpop.permute.xlu0 %302
    %304 = vrot.lane.b32.xlu0 %v285, 120
    %v305 = vpop.permute.xlu0 %304
    %306 = vrot.lane.b32.xlu0 %v272, 112
    %v307 = vpop.permute.xlu0 %306
    %308 = vrot.lane.b32.xlu0 %v278, 112
    %v309 = vpop.permute.xlu0 %308
    %310 = vrot.lane.b32.xlu0 %v279, 112
    %v311 = vpop.permute.xlu0 %310
    %312 = vrot.lane.b32.xlu0 %v280, 112
    %v313 = vpop.permute.xlu0 %312
    %314 = vrot.lane.b32.xlu0 %v281, 112
    %v315 = vpop.permute.xlu0 %314
    %316 = vrot.lane.b32.xlu0 %v282, 112
    %v317 = vpop.permute.xlu0 %316
    %318 = vrot.lane.b32.xlu0 %v283, 112
    %v319 = vpop.permute.xlu0 %318
    %320 = vrot.lane.b32.xlu0 %v284, 112
    %v321 = vpop.permute.xlu0 %320
    %322 = vrot.lane.b32.xlu0 %v274, 112
    %v323 = vpop.permute.xlu0 %322
    %324 = vrot.lane.b32.xlu0 %v285, 112
    %v325 = vpop.permute.xlu0 %324
    %326 = vrot.lane.b32.xlu0 %v272, 104
    %v327 = vpop.permute.xlu0 %326
    %328 = vrot.lane.b32.xlu0 %v278, 104
    %v329 = vpop.permute.xlu0 %328
    %330 = vrot.lane.b32.xlu0 %v279, 104
    %v331 = vpop.permute.xlu0 %330
    %332 = vrot.lane.b32.xlu0 %v280, 104
    %v333 = vpop.permute.xlu0 %332
    %334 = vrot.lane.b32.xlu0 %v281, 104
    %v335 = vpop.permute.xlu0 %334
    %336 = vrot.lane.b32.xlu0 %v282, 104
    %v337 = vpop.permute.xlu0 %336
    %338 = vrot.lane.b32.xlu0 %v283, 104
    %v339 = vpop.permute.xlu0 %338
    %340 = vrot.lane.b32.xlu0 %v284, 104
    %v341 = vpop.permute.xlu0 %340
    %342 = vrot.lane.b32.xlu0 %v274, 104
    %v343 = vpop.permute.xlu0 %342
    %344 = vrot.lane.b32.xlu0 %v285, 104
    %v345 = vpop.permute.xlu0 %344
    %346 = vst [vmem:[#allocation1] ss:$9 sm:$0xff] %v272
    %s347 = scalar_lea.vmem [#allocation1], 1
    %348 = vst [vmem:[%s347] ss:$9 sm:$0xff] %v278
    %s349 = scalar_lea.vmem [#allocation1], 2
    %350 = vst [vmem:[%s349] ss:$9 sm:$0xff] %v279
    %s351 = scalar_lea.vmem [#allocation1], 3
    %352 = vst [vmem:[%s351] ss:$9 sm:$0xff] %v280
    %s353 = scalar_lea.vmem [#allocation1], 4
    %354 = vst [vmem:[%s353] ss:$9 sm:$0xff] %v281
    %v355 = vld [vmem:[#allocation1] sm:$0xff]
    %356 = vst [vmem:[#allocation1] ss:$9 sm:$0xff] %v282
    %357 = vst [vmem:[%s347] ss:$9 sm:$0xff] %v283
    %358 = vst [vmem:[%s349] ss:$9 sm:$0xff] %v284
    %359 = vst [vmem:[%s351] ss:$9 sm:$0xff] %v274
    %360 = vst [vmem:[%s353] ss:$9 sm:$0xff] %v285
    %v361 = vld [vmem:[#allocation1] sm:$0xff]
    %362 = vst [vmem:[#allocation1] ss:$9 sm:$0xff] %v287
    %363 = vst [vmem:[%s347] ss:$9 sm:$0xff] %v289
    %364 = vst [vmem:[%s349] ss:$9 sm:$0xff] %v291
    %365 = vst [vmem:[%s351] ss:$9 sm:$0xff] %v293
    %366 = vst [vmem:[%s353] ss:$9 sm:$0xff] %v295
    %v367 = vld [vmem:[#allocation1] sm:$0xff]
    %368 = vst [vmem:[#allocation1] ss:$9 sm:$0xff] %v297
    %369 = vst [vmem:[%s347] ss:$9 sm:$0xff] %v299
    %370 = vst [vmem:[%s349] ss:$9 sm:$0xff] %v301
    %371 = vst [vmem:[%s351] ss:$9 sm:$0xff] %v303
    %372 = vst [vmem:[%s353] ss:$9 sm:$0xff] %v305
    %v373 = vld [vmem:[#allocation1] sm:$0xff]
    %374 = vst [vmem:[#allocation1] ss:$9 sm:$0xff] %v307
    %375 = vst [vmem:[%s347] ss:$9 sm:$0xff] %v309
    %376 = vst [vmem:[%s349] ss:$9 sm:$0xff] %v311
    %377 = vst [vmem:[%s351] ss:$9 sm:$0xff] %v313
    %378 = vst [vmem:[%s353] ss:$9 sm:$0xff] %v315
    %v379 = vld [vmem:[#allocation1] sm:$0xff]
    %380 = vst [vmem:[#allocation1] ss:$9 sm:$0xff] %v317
    %381 = vst [vmem:[%s347] ss:$9 sm:$0xff] %v319
    %382 = vst [vmem:[%s349] ss:$9 sm:$0xff] %v321
    %383 = vst [vmem:[%s351] ss:$9 sm:$0xff] %v323
    %384 = vst [vmem:[%s353] ss:$9 sm:$0xff] %v325
    %v385 = vld [vmem:[#allocation1] sm:$0xff]
    %386 = vst [vmem:[#allocation1] ss:$9 sm:$0xff] %v327
    %387 = vst [vmem:[%s347] ss:$9 sm:$0xff] %v329
    %388 = vst [vmem:[%s349] ss:$9 sm:$0xff] %v331
    %389 = vst [vmem:[%s351] ss:$9 sm:$0xff] %v333
    %390 = vst [vmem:[%s353] ss:$9 sm:$0xff] %v335
    %v391 = vld [vmem:[#allocation1] sm:$0xff]
    %392 = vst [vmem:[#allocation1] ss:$9 sm:$0xff] %v337
    %393 = vst [vmem:[%s347] ss:$9 sm:$0xff] %v339
    %394 = vst [vmem:[%s349] ss:$9 sm:$0xff] %v341
    %395 = vst [vmem:[%s351] ss:$9 sm:$0xff] %v343
    %396 = vst [vmem:[%s353] ss:$9 sm:$0xff] %v345
    %v397 = vld [vmem:[#allocation1] sm:$0xff]
    %v406 = vpack.c.bf16 %v355, %v355
    %v407 = vpack.c.bf16 %v361, %v361
    %v408 = vpack.c.bf16 %v367, %v367
    %v409 = vpack.c.bf16 %v373, %v373
    %v410 = vpack.c.bf16 %v379, %v379
    %v411 = vpack.c.bf16 %v385, %v385
    %v412 = vpack.c.bf16 %v391, %v391
    %v413 = vpack.c.bf16 %v397, %v397
    %414 = vst [vmem:[#allocation1] ss:$9 sm:$0xff] %v272
    %s415 = scalar_lea.vmem [#allocation1], 1
    %416 = vst [vmem:[%s415] ss:$9 sm:$0xff] %v278
    %s417 = scalar_lea.vmem [#allocation1], 2
    %418 = vst [vmem:[%s417] ss:$9 sm:$0xff] %v279
    %s419 = scalar_lea.vmem [#allocation1], 3
    %420 = vst [vmem:[%s419] ss:$9 sm:$0xff] %v280
    %s421 = scalar_lea.vmem [#allocation1], 4
    %422 = vst [vmem:[%s421] ss:$9 sm:$0xff] %v281
    %v423 = vld [vmem:[#allocation1] sm:$0xff]
    %424 = vst [vmem:[#allocation1] ss:$9 sm:$0xff] %v282
    %425 = vst [vmem:[%s415] ss:$9 sm:$0xff] %v283
    %426 = vst [vmem:[%s417] ss:$9 sm:$0xff] %v284
    %427 = vst [vmem:[%s419] ss:$9 sm:$0xff] %v274
    %428 = vst [vmem:[%s421] ss:$9 sm:$0xff] %v285
    %v429 = vld [vmem:[#allocation1] sm:$0xff]
    %430 = vst [vmem:[#allocation1] ss:$9 sm:$0xff] %v287
    %431 = vst [vmem:[%s415] ss:$9 sm:$0xff] %v289
    %432 = vst [vmem:[%s417] ss:$9 sm:$0xff] %v291
    %433 = vst [vmem:[%s419] ss:$9 sm:$0xff] %v293
    %434 = vst [vmem:[%s421] ss:$9 sm:$0xff] %v295
    %v435 = vld [vmem:[#allocation1] sm:$0xff]
    %436 = vst [vmem:[#allocation1] ss:$9 sm:$0xff] %v297
    %437 = vst [vmem:[%s415] ss:$9 sm:$0xff] %v299
    %438 = vst [vmem:[%s417] ss:$9 sm:$0xff] %v301
    %439 = vst [vmem:[%s419] ss:$9 sm:$0xff] %v303
    %440 = vst [vmem:[%s421] ss:$9 sm:$0xff] %v305
    %v441 = vld [vmem:[#allocation1] sm:$0xff]
    %442 = vst [vmem:[#allocation1] ss:$9 sm:$0xff] %v307
    %443 = vst [vmem:[%s415] ss:$9 sm:$0xff] %v309
    %444 = vst [vmem:[%s417] ss:$9 sm:$0xff] %v311
    %445 = vst [vmem:[%s419] ss:$9 sm:$0xff] %v313
    %446 = vst [vmem:[%s421] ss:$9 sm:$0xff] %v315
    %v447 = vld [vmem:[#allocation1] sm:$0xff]
    %448 = vst [vmem:[#allocation1] ss:$9 sm:$0xff] %v317
    %449 = vst [vmem:[%s415] ss:$9 sm:$0xff] %v319
    %450 = vst [vmem:[%s417] ss:$9 sm:$0xff] %v321
    %451 = vst [vmem:[%s419] ss:$9 sm:$0xff] %v323
    %452 = vst [vmem:[%s421] ss:$9 sm:$0xff] %v325
    %v453 = vld [vmem:[#allocation1] sm:$0xff]
    %454 = vst [vmem:[#allocation1] ss:$9 sm:$0xff] %v327
    %455 = vst [vmem:[%s415] ss:$9 sm:$0xff] %v329
    %456 = vst [vmem:[%s417] ss:$9 sm:$0xff] %v331
    %457 = vst [vmem:[%s419] ss:$9 sm:$0xff] %v333
    %458 = vst [vmem:[%s421] ss:$9 sm:$0xff] %v335
    %v459 = vld [vmem:[#allocation1] sm:$0xff]
    %460 = vst [vmem:[#allocation1] ss:$9 sm:$0xff] %v337
    %461 = vst [vmem:[%s415] ss:$9 sm:$0xff] %v339
    %462 = vst [vmem:[%s417] ss:$9 sm:$0xff] %v341
    %463 = vst [vmem:[%s419] ss:$9 sm:$0xff] %v343
    %464 = vst [vmem:[%s421] ss:$9 sm:$0xff] %v345
    %v465 = vld [vmem:[#allocation1] sm:$0xff]
    %v474 = vpack.c.bf16 %v423, %v423
    %v475 = vpack.c.bf16 %v429, %v429
    %v476 = vpack.c.bf16 %v435, %v435
    %v477 = vpack.c.bf16 %v441, %v441
    %v478 = vpack.c.bf16 %v447, %v447
    %v479 = vpack.c.bf16 %v453, %v453
    %v480 = vpack.c.bf16 %v459, %v459
    %v481 = vpack.c.bf16 %v465, %v465
    %v483 = vunpack.c.l.b16 %v474
    %v484 = vpack.c.b16 %v483, %v483
    %485 = vrot.lane.b32.xlu0 %v484, 96
    %v486 = vpop.permute.xlu0 %485
    %vm487 = vcmask 64512
    %v489 = vsel %vm487, %v406, 0
    %v492 = vsel %vm487, %v486, 0
    %494 = vmatpush.bf16.xpose.msra.mxu0 0
    %495 = vmatpush.bf16.xpose.msra.mxu0 0
    %496 = vmatpush.bf16.xpose.msra.mxu0 0
    %497 = vmatpush.bf16.xpose.msra.mxu0 0
    %498 = vmatpush.bf16.xpose.msra.mxu0 0
    %499 = vmatpush.bf16.xpose.msra.mxu0 0
    %500 = vmatpush.bf16.xpose.msra.mxu0 0
    %501 = vmatpush.bf16.xpose.msra.mxu0 %v492
    %502 = vmatmul.bf16.gmra.mxu0 %v489
    %v503 = vpop.f32.mrf.mxu0
    %v504 = vadd.f32 0.0, %v503
    %v505 = vpop.f32.mrf.mxu0
    %506 = vdwg.mxu0
    %v508 = vunpack.c.l.b16 %v475
    %v509 = vpack.c.b16 %v508, %v508
    %510 = vrot.lane.b32.xlu0 %v509, 96
    %v511 = vpop.permute.xlu0 %510
    %v513 = vsel %vm487, %v407, 0
    %v516 = vsel %vm487, %v511, 0
    %518 = vmatpush.bf16.xpose.msra.mxu0 0
    %519 = vmatpush.bf16.xpose.msra.mxu0 0
    %520 = vmatpush.bf16.xpose.msra.mxu0 0
    %521 = vmatpush.bf16.xpose.msra.mxu0 0
    %522 = vmatpush.bf16.xpose.msra.mxu0 0
    %523 = vmatpush.bf16.xpose.msra.mxu0 0
    %524 = vmatpush.bf16.xpose.msra.mxu0 0
    %525 = vmatpush.bf16.xpose.msra.mxu0 %v516
    %526 = vmatmul.bf16.gmra.mxu0 %v513
    %v527 = vpop.f32.mrf.mxu0
    %v528 = vadd.f32 0.0, %v527
    %v529 = vpop.f32.mrf.mxu0
    %530 = vdwg.mxu0
    %v532 = vunpack.c.l.b16 %v476
    %v533 = vpack.c.b16 %v532, %v532
    %534 = vrot.lane.b32.xlu0 %v533, 96
    %v535 = vpop.permute.xlu0 %534
    %v537 = vsel %vm487, %v408, 0
    %v540 = vsel %vm487, %v535, 0
    %542 = vmatpush.bf16.xpose.msra.mxu0 0
    %543 = vmatpush.bf16.xpose.msra.mxu0 0
    %544 = vmatpush.bf16.xpose.msra.mxu0 0
    %545 = vmatpush.bf16.xpose.msra.mxu0 0
    %546 = vmatpush.bf16.xpose.msra.mxu0 0
    %547 = vmatpush.bf16.xpose.msra.mxu0 0
    %548 = vmatpush.bf16.xpose.msra.mxu0 0
    %549 = vmatpush.bf16.xpose.msra.mxu0 %v540
    %550 = vmatmul.bf16.gmra.mxu0 %v537
    %v551 = vpop.f32.mrf.mxu0
    %v552 = vadd.f32 0.0, %v551
    %v553 = vpop.f32.mrf.mxu0
    %554 = vdwg.mxu0
    %v556 = vunpack.c.l.b16 %v477
    %v557 = vpack.c.b16 %v556, %v556
    %558 = vrot.lane.b32.xlu0 %v557, 96
    %v559 = vpop.permute.xlu0 %558
    %v561 = vsel %vm487, %v409, 0
    %v564 = vsel %vm487, %v559, 0
    %566 = vmatpush.bf16.xpose.msra.mxu0 0
    %567 = vmatpush.bf16.xpose.msra.mxu0 0
    %568 = vmatpush.bf16.xpose.msra.mxu0 0
    %569 = vmatpush.bf16.xpose.msra.mxu0 0
    %570 = vmatpush.bf16.xpose.msra.mxu0 0
    %571 = vmatpush.bf16.xpose.msra.mxu0 0
    %572 = vmatpush.bf16.xpose.msra.mxu0 0
    %573 = vmatpush.bf16.xpose.msra.mxu0 %v564
    %574 = vmatmul.bf16.gmra.mxu0 %v561
    %v575 = vpop.f32.mrf.mxu0
    %v576 = vadd.f32 0.0, %v575
    %v577 = vpop.f32.mrf.mxu0
    %578 = vdwg.mxu0
    %v580 = vunpack.c.l.b16 %v478
    %v581 = vpack.c.b16 %v580, %v580
    %582 = vrot.lane.b32.xlu0 %v581, 96
    %v583 = vpop.permute.xlu0 %582
    %v585 = vsel %vm487, %v410, 0
    %v588 = vsel %vm487, %v583, 0
    %590 = vmatpush.bf16.xpose.msra.mxu0 0
    %591 = vmatpush.bf16.xpose.msra.mxu0 0
    %592 = vmatpush.bf16.xpose.msra.mxu0 0
    %593 = vmatpush.bf16.xpose.msra.mxu0 0
    %594 = vmatpush.bf16.xpose.msra.mxu0 0
    %595 = vmatpush.bf16.xpose.msra.mxu0 0
    %596 = vmatpush.bf16.xpose.msra.mxu0 0
    %597 = vmatpush.bf16.xpose.msra.mxu0 %v588
    %598 = vmatmul.bf16.gmra.mxu0 %v585
    %v599 = vpop.f32.mrf.mxu0
    %v600 = vadd.f32 0.0, %v599
    %v601 = vpop.f32.mrf.mxu0
    %602 = vdwg.mxu0
    %v604 = vunpack.c.l.b16 %v479
    %v605 = vpack.c.b16 %v604, %v604
    %606 = vrot.lane.b32.xlu0 %v605, 96
    %v607 = vpop.permute.xlu0 %606
    %v609 = vsel %vm487, %v411, 0
    %v612 = vsel %vm487, %v607, 0
    %614 = vmatpush.bf16.xpose.msra.mxu0 0
    %615 = vmatpush.bf16.xpose.msra.mxu0 0
    %616 = vmatpush.bf16.xpose.msra.mxu0 0
    %617 = vmatpush.bf16.xpose.msra.mxu0 0
    %618 = vmatpush.bf16.xpose.msra.mxu0 0
    %619 = vmatpush.bf16.xpose.msra.mxu0 0
    %620 = vmatpush.bf16.xpose.msra.mxu0 0
    %621 = vmatpush.bf16.xpose.msra.mxu0 %v612
    %622 = vmatmul.bf16.gmra.mxu0 %v609
    %v623 = vpop.f32.mrf.mxu0
    %v624 = vadd.f32 0.0, %v623
    %v625 = vpop.f32.mrf.mxu0
    %626 = vdwg.mxu0
    %v628 = vunpack.c.l.b16 %v480
    %v629 = vpack.c.b16 %v628, %v628
    %630 = vrot.lane.b32.xlu0 %v629, 96
    %v631 = vpop.permute.xlu0 %630
    %v633 = vsel %vm487, %v412, 0
    %v636 = vsel %vm487, %v631, 0
    %638 = vmatpush.bf16.xpose.msra.mxu0 0
    %639 = vmatpush.bf16.xpose.msra.mxu0 0
    %640 = vmatpush.bf16.xpose.msra.mxu0 0
    %641 = vmatpush.bf16.xpose.msra.mxu0 0
    %642 = vmatpush.bf16.xpose.msra.mxu0 0
    %643 = vmatpush.bf16.xpose.msra.mxu0 0
    %644 = vmatpush.bf16.xpose.msra.mxu0 0
    %645 = vmatpush.bf16.xpose.msra.mxu0 %v636
    %646 = vmatmul.bf16.gmra.mxu0 %v633
    %v647 = vpop.f32.mrf.mxu0
    %v648 = vadd.f32 0.0, %v647
    %v649 = vpop.f32.mrf.mxu0
    %650 = vdwg.mxu0
    %v652 = vunpack.c.l.b16 %v481
    %v653 = vpack.c.b16 %v652, %v652
    %654 = vrot.lane.b32.xlu0 %v653, 96
    %v655 = vpop.permute.xlu0 %654
    %v657 = vsel %vm487, %v413, 0
    %v660 = vsel %vm487, %v655, 0
    %662 = vmatpush.bf16.xpose.msra.mxu0 0
    %663 = vmatpush.bf16.xpose.msra.mxu0 0
    %664 = vmatpush.bf16.xpose.msra.mxu0 0
    %665 = vmatpush.bf16.xpose.msra.mxu0 0
    %666 = vmatpush.bf16.xpose.msra.mxu0 0
    %667 = vmatpush.bf16.xpose.msra.mxu0 0
    %668 = vmatpush.bf16.xpose.msra.mxu0 0
    %669 = vmatpush.bf16.xpose.msra.mxu0 %v660
    %670 = vmatmul.bf16.gmra.mxu0 %v657
    %v671 = vpop.f32.mrf.mxu0
    %v672 = vadd.f32 0.0, %v671
    %v673 = vpop.f32.mrf.mxu0
    %674 = vdwg.mxu0
    %vm675 = vcmask 36864
    %v676 = vsel %vm675, %v504, -inf
    %677 = vmax.xlane.f32.xlu0 %v676
    %v678 = vpop.xlane.xlu0 %677
    %v679 = vsel %vm675, %v528, -inf
    %680 = vmax.xlane.f32.xlu0 %v679
    %v681 = vpop.xlane.xlu0 %680
    %v682 = vsel %vm675, %v552, -inf
    %683 = vmax.xlane.f32.xlu0 %v682
    %v684 = vpop.xlane.xlu0 %683
    %v685 = vsel %vm675, %v576, -inf
    %686 = vmax.xlane.f32.xlu0 %v685
    %v687 = vpop.xlane.xlu0 %686
    %v688 = vsel %vm675, %v600, -inf
    %689 = vmax.xlane.f32.xlu0 %v688
    %v690 = vpop.xlane.xlu0 %689
    %v691 = vsel %vm675, %v624, -inf
    %692 = vmax.xlane.f32.xlu0 %v691
    %v693 = vpop.xlane.xlu0 %692
    %v694 = vsel %vm675, %v648, -inf
    %695 = vmax.xlane.f32.xlu0 %v694
    %v696 = vpop.xlane.xlu0 %695
    %v697 = vsel %vm675, %v672, -inf
    %698 = vmax.xlane.f32.xlu0 %v697
    %v699 = vpop.xlane.xlu0 %698
    %v700 = vsub.f32 %v504, %v678
    %v701 = vsub.f32 %v528, %v681
    %v702 = vsub.f32 %v552, %v684
    %v703 = vsub.f32 %v576, %v687
    %v704 = vsub.f32 %v600, %v690
    %v705 = vsub.f32 %v624, %v693
    %v706 = vsub.f32 %v648, %v696
    %v707 = vsub.f32 %v672, %v699
    %v708 = vmul.f32 %v700, 1.442695
    %v709 = vpow.pop %v708
    %v710 = vmul.f32 %v701, 1.442695
    %v711 = vpow.pop %v710
    %v712 = vmul.f32 %v702, 1.442695
    %v713 = vpow.pop %v712
    %v714 = vmul.f32 %v703, 1.442695
    %v715 = vpow.pop %v714
    %v716 = vmul.f32 %v704, 1.442695
    %v717 = vpow.pop %v716
    %v718 = vmul.f32 %v705, 1.442695
    %v719 = vpow.pop %v718
    %v720 = vmul.f32 %v706, 1.442695
    %v721 = vpow.pop %v720
    %v722 = vmul.f32 %v707, 1.442695
    %v723 = vpow.pop %v722
    %v724 = vsel %vm675, %v709, 0.0
    %725 = vadd.xlane.f32.xlu0 %v724
    %v726 = vpop.xlane.xlu0 %725
    %v727 = vsel %vm675, %v711, 0.0
    %728 = vadd.xlane.f32.xlu0 %v727
    %v729 = vpop.xlane.xlu0 %728
    %v730 = vsel %vm675, %v713, 0.0
    %731 = vadd.xlane.f32.xlu0 %v730
    %v732 = vpop.xlane.xlu0 %731
    %v733 = vsel %vm675, %v715, 0.0
    %734 = vadd.xlane.f32.xlu0 %v733
    %v735 = vpop.xlane.xlu0 %734
    %v736 = vsel %vm675, %v717, 0.0
    %737 = vadd.xlane.f32.xlu0 %v736
    %v738 = vpop.xlane.xlu0 %737
    %v739 = vsel %vm675, %v719, 0.0
    %740 = vadd.xlane.f32.xlu0 %v739
    %v741 = vpop.xlane.xlu0 %740
    %v742 = vsel %vm675, %v721, 0.0
    %743 = vadd.xlane.f32.xlu0 %v742
    %v744 = vpop.xlane.xlu0 %743
    %v745 = vsel %vm675, %v723, 0.0
    %746 = vadd.xlane.f32.xlu0 %v745
    %v747 = vpop.xlane.xlu0 %746
    %v748 = vrcp.pop %v726
    %v749 = vrcp.pop %v729
    %v750 = vrcp.pop %v732
    %v751 = vrcp.pop %v735
    %v752 = vrcp.pop %v738
    %v753 = vrcp.pop %v741
    %v754 = vrcp.pop %v744
    %v755 = vrcp.pop %v747
    %v756 = vmul.f32 %v709, %v748
    %v757 = vmul.f32 %v711, %v749
    %v758 = vmul.f32 %v713, %v750
    %v759 = vmul.f32 %v715, %v751
    %v760 = vmul.f32 %v717, %v752
    %v761 = vmul.f32 %v719, %v753
    %v762 = vmul.f32 %v721, %v754
    %v763 = vmul.f32 %v723, %v755
    %v764 = vpack.c.bf16 %v756, %v756
    %v765 = vpack.c.bf16 %v757, %v757
    %v766 = vpack.c.bf16 %v758, %v758
    %v767 = vpack.c.bf16 %v759, %v759
    %v768 = vpack.c.bf16 %v760, %v760
    %v769 = vpack.c.bf16 %v761, %v761
    %v770 = vpack.c.bf16 %v762, %v762
    %v771 = vpack.c.bf16 %v763, %v763
    %772 = vst [vmem:[#allocation1] ss:$9 sm:$0xff] %v272
    %s773 = scalar_lea.vmem [#allocation1], 1
    %774 = vst [vmem:[%s773] ss:$9 sm:$0xff] %v278
    %s775 = scalar_lea.vmem [#allocation1], 2
    %776 = vst [vmem:[%s775] ss:$9 sm:$0xff] %v279
    %s777 = scalar_lea.vmem [#allocation1], 3
    %778 = vst [vmem:[%s777] ss:$9 sm:$0xff] %v280
    %s779 = scalar_lea.vmem [#allocation1], 4
    %780 = vst [vmem:[%s779] ss:$9 sm:$0xff] %v281
    %v781 = vld [vmem:[#allocation1] sm:$0xff]
    %782 = vst [vmem:[#allocation1] ss:$9 sm:$0xff] %v282
    %783 = vst [vmem:[%s773] ss:$9 sm:$0xff] %v283
    %784 = vst [vmem:[%s775] ss:$9 sm:$0xff] %v284
    %785 = vst [vmem:[%s777] ss:$9 sm:$0xff] %v274
    %786 = vst [vmem:[%s779] ss:$9 sm:$0xff] %v285
    %v787 = vld [vmem:[#allocation1] sm:$0xff]
    %788 = vst [vmem:[#allocation1] ss:$9 sm:$0xff] %v287
    %789 = vst [vmem:[%s773] ss:$9 sm:$0xff] %v289
    %790 = vst [vmem:[%s775] ss:$9 sm:$0xff] %v291
    %791 = vst [vmem:[%s777] ss:$9 sm:$0xff] %v293
    %792 = vst [vmem:[%s779] ss:$9 sm:$0xff] %v295
    %v793 = vld [vmem:[#allocation1] sm:$0xff]
    %794 = vst [vmem:[#allocation1] ss:$9 sm:$0xff] %v297
    %795 = vst [vmem:[%s773] ss:$9 sm:$0xff] %v299
    %796 = vst [vmem:[%s775] ss:$9 sm:$0xff] %v301
    %797 = vst [vmem:[%s777] ss:$9 sm:$0xff] %v303
    %798 = vst [vmem:[%s779] ss:$9 sm:$0xff] %v305
    %v799 = vld [vmem:[#allocation1] sm:$0xff]
    %800 = vst [vmem:[#allocation1] ss:$9 sm:$0xff] %v307
    %801 = vst [vmem:[%s773] ss:$9 sm:$0xff] %v309
    %802 = vst [vmem:[%s775] ss:$9 sm:$0xff] %v311
    %803 = vst [vmem:[%s777] ss:$9 sm:$0xff] %v313
    %804 = vst [vmem:[%s779] ss:$9 sm:$0xff] %v315
    %v805 = vld [vmem:[#allocation1] sm:$0xff]
    %806 = vst [vmem:[#allocation1] ss:$9 sm:$0xff] %v317
    %807 = vst [vmem:[%s773] ss:$9 sm:$0xff] %v319
    %808 = vst [vmem:[%s775] ss:$9 sm:$0xff] %v321
    %809 = vst [vmem:[%s777] ss:$9 sm:$0xff] %v323
    %810 = vst [vmem:[%s779] ss:$9 sm:$0xff] %v325
    %v811 = vld [vmem:[#allocation1] sm:$0xff]
    %812 = vst [vmem:[#allocation1] ss:$9 sm:$0xff] %v327
    %813 = vst [vmem:[%s773] ss:$9 sm:$0xff] %v329
    %814 = vst [vmem:[%s775] ss:$9 sm:$0xff] %v331
    %815 = vst [vmem:[%s777] ss:$9 sm:$0xff] %v333
    %816 = vst [vmem:[%s779] ss:$9 sm:$0xff] %v335
    %v817 = vld [vmem:[#allocation1] sm:$0xff]
    %818 = vst [vmem:[#allocation1] ss:$9 sm:$0xff] %v337
    %819 = vst [vmem:[%s773] ss:$9 sm:$0xff] %v339
    %820 = vst [vmem:[%s775] ss:$9 sm:$0xff] %v341
    %821 = vst [vmem:[%s777] ss:$9 sm:$0xff] %v343
    %822 = vst [vmem:[%s779] ss:$9 sm:$0xff] %v345
    %v823 = vld [vmem:[#allocation1] sm:$0xff]
    %v832 = vpack.c.bf16 %v781, %v781
    %v833 = vpack.c.bf16 %v787, %v787
    %v834 = vpack.c.bf16 %v793, %v793
    %v835 = vpack.c.bf16 %v799, %v799
    %v836 = vpack.c.bf16 %v805, %v805
    %v837 = vpack.c.bf16 %v811, %v811
    %v838 = vpack.c.bf16 %v817, %v817
    %v839 = vpack.c.bf16 %v823, %v823
    %v841 = vunpack.c.l.b16 %v832
    %v842 = vpack.c.b16 %v841, %v841
    %843 = vrot.lane.b32.xlu0 %v842, 64
    %v844 = vpop.permute.xlu0 %843
    %vm845 = vcmask 39936
    %v847 = vsel %vm845, %v764, 0
    %vm849 = vcmask 1041408
    %vm850 = vcmask 1042432
    %v851 = vsel %vm849, 4294967295, 65535
    %v852 = vsel %vm850, %v851, 0
    %v854 = vand.u32 %v844, %v852
    %856 = vmatpush.bf16.msra.mxu0 0
    %857 = vmatpush.bf16.msra.mxu0 0
    %858 = vmatpush.bf16.msra.mxu0 0
    %859 = vmatpush.bf16.msra.mxu0 0
    %860 = vmatpush.bf16.msra.mxu0 0
    %861 = vmatpush.bf16.msra.mxu0 0
    %862 = vmatpush.bf16.msra.mxu0 0
    %863 = vmatpush.bf16.msra.mxu0 %v854
    %864 = vmatmul.bf16.gmra.mxu0 %v847
    %v865 = vpop.f32.mrf.mxu0
    %v866 = vadd.f32 0.0, %v865
    %v867 = vpop.f32.mrf.mxu0
    %868 = vdwg.mxu0
    %v870 = vunpack.c.l.b16 %v833
    %v871 = vpack.c.b16 %v870, %v870
    %872 = vrot.lane.b32.xlu0 %v871, 64
    %v873 = vpop.permute.xlu0 %872
    %v875 = vsel %vm845, %v765, 0
    %v878 = vand.u32 %v873, %v852
    %880 = vmatpush.bf16.msra.mxu0 0
    %881 = vmatpush.bf16.msra.mxu0 0
    %882 = vmatpush.bf16.msra.mxu0 0
    %883 = vmatpush.bf16.msra.mxu0 0
    %884 = vmatpush.bf16.msra.mxu0 0
    %885 = vmatpush.bf16.msra.mxu0 0
    %886 = vmatpush.bf16.msra.mxu0 0
    %887 = vmatpush.bf16.msra.mxu0 %v878
    %888 = vmatmul.bf16.gmra.mxu0 %v875
    %v889 = vpop.f32.mrf.mxu0
    %v890 = vadd.f32 0.0, %v889
    %v891 = vpop.f32.mrf.mxu0
    %892 = vdwg.mxu0
    %v894 = vunpack.c.l.b16 %v834
    %v895 = vpack.c.b16 %v894, %v894
    %896 = vrot.lane.b32.xlu0 %v895, 64
    %v897 = vpop.permute.xlu0 %896
    %v899 = vsel %vm845, %v766, 0
    %v902 = vand.u32 %v897, %v852
    %904 = vmatpush.bf16.msra.mxu0 0
    %905 = vmatpush.bf16.msra.mxu0 0
    %906 = vmatpush.bf16.msra.mxu0 0
    %907 = vmatpush.bf16.msra.mxu0 0
    %908 = vmatpush.bf16.msra.mxu0 0
    %909 = vmatpush.bf16.msra.mxu0 0
    %910 = vmatpush.bf16.msra.mxu0 0
    %911 = vmatpush.bf16.msra.mxu0 %v902
    %912 = vmatmul.bf16.gmra.mxu0 %v899
    %v913 = vpop.f32.mrf.mxu0
    %v914 = vadd.f32 0.0, %v913
    %v915 = vpop.f32.mrf.mxu0
    %916 = vdwg.mxu0
    %v918 = vunpack.c.l.b16 %v835
    %v919 = vpack.c.b16 %v918, %v918
    %920 = vrot.lane.b32.xlu0 %v919, 64
    %v921 = vpop.permute.xlu0 %920
    %v923 = vsel %vm845, %v767, 0
    %v926 = vand.u32 %v921, %v852
    %928 = vmatpush.bf16.msra.mxu0 0
    %929 = vmatpush.bf16.msra.mxu0 0
    %930 = vmatpush.bf16.msra.mxu0 0
    %931 = vmatpush.bf16.msra.mxu0 0
    %932 = vmatpush.bf16.msra.mxu0 0
    %933 = vmatpush.bf16.msra.mxu0 0
    %934 = vmatpush.bf16.msra.mxu0 0
    %935 = vmatpush.bf16.msra.mxu0 %v926
    %936 = vmatmul.bf16.gmra.mxu0 %v923
    %v937 = vpop.f32.mrf.mxu0
    %v938 = vadd.f32 0.0, %v937
    %v939 = vpop.f32.mrf.mxu0
    %940 = vdwg.mxu0
    %v942 = vunpack.c.l.b16 %v836
    %v943 = vpack.c.b16 %v942, %v942
    %944 = vrot.lane.b32.xlu0 %v943, 64
    %v945 = vpop.permute.xlu0 %944
    %v947 = vsel %vm845, %v768, 0
    %v950 = vand.u32 %v945, %v852
    %952 = vmatpush.bf16.msra.mxu0 0
    %953 = vmatpush.bf16.msra.mxu0 0
    %954 = vmatpush.bf16.msra.mxu0 0
    %955 = vmatpush.bf16.msra.mxu0 0
    %956 = vmatpush.bf16.msra.mxu0 0
    %957 = vmatpush.bf16.msra.mxu0 0
    %958 = vmatpush.bf16.msra.mxu0 0
    %959 = vmatpush.bf16.msra.mxu0 %v950
    %960 = vmatmul.bf16.gmra.mxu0 %v947
    %v961 = vpop.f32.mrf.mxu0
    %v962 = vadd.f32 0.0, %v961
    %v963 = vpop.f32.mrf.mxu0
    %964 = vdwg.mxu0
    %v966 = vunpack.c.l.b16 %v837
    %v967 = vpack.c.b16 %v966, %v966
    %968 = vrot.lane.b32.xlu0 %v967, 64
    %v969 = vpop.permute.xlu0 %968
    %v971 = vsel %vm845, %v769, 0
    %v974 = vand.u32 %v969, %v852
    %976 = vmatpush.bf16.msra.mxu0 0
    %977 = vmatpush.bf16.msra.mxu0 0
    %978 = vmatpush.bf16.msra.mxu0 0
    %979 = vmatpush.bf16.msra.mxu0 0
    %980 = vmatpush.bf16.msra.mxu0 0
    %981 = vmatpush.bf16.msra.mxu0 0
    %982 = vmatpush.bf16.msra.mxu0 0
    %983 = vmatpush.bf16.msra.mxu0 %v974
    %984 = vmatmul.bf16.gmra.mxu0 %v971
    %v985 = vpop.f32.mrf.mxu0
    %v986 = vadd.f32 0.0, %v985
    %v987 = vpop.f32.mrf.mxu0
    %988 = vdwg.mxu0
    %v990 = vunpack.c.l.b16 %v838
    %v991 = vpack.c.b16 %v990, %v990
    %992 = vrot.lane.b32.xlu0 %v991, 64
    %v993 = vpop.permute.xlu0 %992
    %v995 = vsel %vm845, %v770, 0
    %v998 = vand.u32 %v993, %v852
    %1000 = vmatpush.bf16.msra.mxu0 0
    %1001 = vmatpush.bf16.msra.mxu0 0
    %1002 = vmatpush.bf16.msra.mxu0 0
    %1003 = vmatpush.bf16.msra.mxu0 0
    %1004 = vmatpush.bf16.msra.mxu0 0
    %1005 = vmatpush.bf16.msra.mxu0 0
    %1006 = vmatpush.bf16.msra.mxu0 0
    %1007 = vmatpush.bf16.msra.mxu0 %v998
    %1008 = vmatmul.bf16.gmra.mxu0 %v995
    %v1009 = vpop.f32.mrf.mxu0
    %v1010 = vadd.f32 0.0, %v1009
    %v1011 = vpop.f32.mrf.mxu0
    %1012 = vdwg.mxu0
    %v1014 = vunpack.c.l.b16 %v839
    %v1015 = vpack.c.b16 %v1014, %v1014
    %1016 = vrot.lane.b32.xlu0 %v1015, 64
    %v1017 = vpop.permute.xlu0 %1016
    %v1019 = vsel %vm845, %v771, 0
    %v1022 = vand.u32 %v1017, %v852
    %1024 = vmatpush.bf16.msra.mxu0 0
    %1025 = vmatpush.bf16.msra.mxu0 0
    %1026 = vmatpush.bf16.msra.mxu0 0
    %1027 = vmatpush.bf16.msra.mxu0 0
    %1028 = vmatpush.bf16.msra.mxu0 0
    %1029 = vmatpush.bf16.msra.mxu0 0
    %1030 = vmatpush.bf16.msra.mxu0 0
    %1031 = vmatpush.bf16.msra.mxu0 %v1022
    %1032 = vmatmul.bf16.gmra.mxu0 %v1019
    %v1033 = vpop.f32.mrf.mxu0
    %v1034 = vadd.f32 0.0, %v1033
    %v1035 = vpop.f32.mrf.mxu0
    %1036 = vdwg.mxu0
    %1039 = vrot.lane.b32.xlu0 %v914, 8
    %v1040 = vpop.permute.xlu0 %1039
    %1041 = vrot.lane.b32.xlu0 %v938, 8
    %v1042 = vpop.permute.xlu0 %1041
    %1047 = vrot.lane.b32.xlu0 %v962, 16
    %v1048 = vpop.permute.xlu0 %1047
    %1049 = vrot.lane.b32.xlu0 %v986, 16
    %v1050 = vpop.permute.xlu0 %1049
    %1055 = vrot.lane.b32.xlu0 %v1010, 24
    %v1056 = vpop.permute.xlu0 %1055
    %1057 = vrot.lane.b32.xlu0 %v1034, 24
    %v1058 = vpop.permute.xlu0 %1057
    %v1061 = vsel %vm487, %v866, %v1040
    %v1062 = vsel %vm487, %v890, %v1042
    %vm1063 = vcmask 130048
    %v1064 = vsel %vm1063, %v1061, %v1048
    %v1065 = vsel %vm1063, %v1062, %v1050
    %vm1066 = vcmask 195584
    %v1067 = vsel %vm1066, %v1064, %v1056
    %v1068 = vsel %vm1066, %v1065, %v1058
    %v1071 = vrot.slane %v1067, 1
    %v1072 = vrot.slane %v1067, 2
    %v1073 = vrot.slane %v1067, 3
    %v1074 = vrot.slane %v1067, 4
    %v1075 = vrot.slane %v1068, 1
    %v1076 = vrot.slane %v1068, 2
    %v1077 = vrot.slane %v1068, 3
    %v1078 = vrot.slane %v1068, 4
    %1079 = vst [vmem:[#allocation1] ss:$9 sm:$0xff] %v1067
    %s1080 = scalar_lea.vmem [#allocation1], 1
    %1081 = vst [vmem:[%s1080] ss:$9 sm:$0xff] %v1071
    %s1082 = scalar_lea.vmem [#allocation1], 2
    %1083 = vst [vmem:[%s1082] ss:$9 sm:$0xff] %v1072
    %s1084 = scalar_lea.vmem [#allocation1], 3
    %1085 = vst [vmem:[%s1084] ss:$9 sm:$0xff] %v1073
    %s1086 = scalar_lea.vmem [#allocation1], 4
    %1087 = vst [vmem:[%s1086] ss:$9 sm:$0xff] %v1074
    %s1088 = scalar_lea.vmem [#allocation1], 5
    %1089 = vst [vmem:[%s1088] ss:$9 sm:$0xff] %v1068
    %s1090 = scalar_lea.vmem [#allocation1], 6
    %1091 = vst [vmem:[%s1090] ss:$9 sm:$0xff] %v1075
    %s1092 = scalar_lea.vmem [#allocation1], 7
    %1093 = vst [vmem:[%s1092] ss:$9 sm:$0xff] %v1076
    %v1094 = vld [vmem:[#allocation1] sm:$0xff]
    %1095 = vst [vmem:[#allocation1] ss:$9 sm:$0xff] %v1077
    %1096 = vst [vmem:[%s1080] ss:$9 sm:$0xff] %v1078
    %v1097 = vld [vmem:[#allocation1] sm:$0xff]
    %v1100 = vpack.c.bf16 %v1097, %v1094
    %v1101 = vld [vmem:[%s6] sm:$0xf]
    %v1102 = vld [vmem:[%s6 + $0x4] sm:$0xf]
    %v1103 = vld [vmem:[%s6 + $0x8] sm:$0xf]
    %v1104 = vld [vmem:[%s6 + $0xc] sm:$0xf]
    %v1109 = vunpack.c.l.b16 %v1101
    %v1110 = vunpack.c.l.b16 %v1102
    %v1111 = vunpack.c.l.b16 %v1103
    %v1112 = vunpack.c.l.b16 %v1104
    %v1113 = vpack.c.b16 %v1110, %v1109
    %v1114 = vpack.c.b16 %v1112, %v1111
    %v1118 = vsel %vm129, %v1100, 0
    %1120 = vmatpush.bf16.msra.mxu0 0
    %1121 = vmatpush.bf16.msra.mxu0 0
    %1122 = vmatpush.bf16.msra.mxu0 0
    %1123 = vmatpush.bf16.msra.mxu0 0
    %1124 = vmatpush.bf16.msra.mxu0 0
    %1125 = vmatpush.bf16.msra.mxu0 0
    %1126 = vmatpush.bf16.msra.mxu0 %v1114
    %1127 = vmatpush.bf16.msra.mxu0 %v1113
    %1128 = vmatmul.bf16.gmra.mxu0 %v1118
    %v1129 = vpop.f32.mrf.mxu0
    %v1130 = vadd.f32 0.0, %v1129
    %v1131 = vpop.f32.mrf.mxu0
    %v1132 = vadd.f32 0.0, %v1131
    %1133 = vdwg.mxu0
    %v1134 = vadd.f32 %v192, %v1130
    %v1135 = vadd.f32 %v193, %v1132
    %v1136 = vld [vmem:[%s7] sm:$0x1]
    %v1138 = vperm.slane %v1136, 0
    %v1140 = vadd.f32 %v1134, %v1138
    %v1141 = vadd.f32 %v1135, %v1138
    %v1142 = vsel %vm129, %v1140, 0.0
    %1143 = vadd.xlane.f32.xlu0 %v1142
    %v1144 = vpop.xlane.xlu0 %1143
    %v1145 = vsel %vm133, %v1141, 0.0
    %1146 = vadd.xlane.f32.xlu0 %v1145
    %v1147 = vpop.xlane.xlu0 %1146
    %v1148 = vmul.f32 %v1144, %v143
    %v1149 = vmul.f32 %v1147, %v143
    %v1150 = vsub.f32 %v1140, %v1148
    %v1151 = vsub.f32 %v1141, %v1149
    %v1152 = vmul.f32 %v1150, %v1150
    %v1153 = vmul.f32 %v1151, %v1151
    %v1154 = vsel %vm129, %v1152, 0.0
    %1155 = vadd.xlane.f32.xlu0 %v1154
    %v1156 = vpop.xlane.xlu0 %1155
    %v1157 = vsel %vm133, %v1153, 0.0
    %1158 = vadd.xlane.f32.xlu0 %v1157
    %v1159 = vpop.xlane.xlu0 %1158
    %v1160 = vmul.f32 %v1156, %v143
    %v1161 = vmul.f32 %v1159, %v143
    %v1162 = vadd.f32 %v1160, 1e-05
    %v1163 = vadd.f32 %v1161, 1e-05
    %v1164 = vrsqrt.pop %v1162
    %v1165 = vmul.f32 %v1164, %v1162
    %v1166 = vmul.f32 %v1165, %v1164
    %v1167 = vmul.f32 0.5, %v1166
    %v1168 = vsub.f32 1.5, %v1167
    %v1169 = vmul.f32 %v1164, %v1168
    %vm1170 = vweird.f32 %v1162
    %vm1171 = vweird.f32 %v1164
    %vm1172 = vmor %vm1170, %vm1171
    %v1173 = vsel %vm1172, %v1164, %v1169
    %v1174 = vrsqrt.pop %v1163
    %v1175 = vmul.f32 %v1174, %v1163
    %v1176 = vmul.f32 %v1175, %v1174
    %v1177 = vmul.f32 0.5, %v1176
    %v1178 = vsub.f32 1.5, %v1177
    %v1179 = vmul.f32 %v1174, %v1178
    %vm1180 = vweird.f32 %v1163
    %vm1181 = vweird.f32 %v1174
    %vm1182 = vmor %vm1180, %vm1181
    %v1183 = vsel %vm1182, %v1174, %v1179
    %v1184 = vmul.f32 %v1150, %v1173
    %v1185 = vmul.f32 %v1151, %v1183
    %v1186 = vpack.c.bf16 %v1185, %v1184
    %v1187 = vld [vmem:[%s8] sm:$0xf]
    %v1188 = vld [vmem:[%s8 + $0x4] sm:$0xf]
    %v1189 = vld [vmem:[%s8 + $0x8] sm:$0xf]
    %v1190 = vld [vmem:[%s8 + $0xc] sm:$0xf]
    %v1191 = vld [vmem:[%s9] sm:$0x1]
    %v1193 = vperm.slane %v1191, 0
    %v1199 = vunpack.c.l.b16 %v1187
    %v1200 = vunpack.c.l.b16 %v1188
    %v1201 = vunpack.c.l.b16 %v1189
    %v1202 = vunpack.c.l.b16 %v1190
    %v1203 = vpack.c.b16 %v1200, %v1199
    %v1204 = vpack.c.b16 %v1202, %v1201
    %v1208 = vsel %vm129, %v1186, 0
    %1210 = vmatpush.bf16.msra.mxu0 0
    %1211 = vmatpush.bf16.msra.mxu0 0
    %1212 = vmatpush.bf16.msra.mxu0 0
    %1213 = vmatpush.bf16.msra.mxu0 0
    %1214 = vmatpush.bf16.msra.mxu0 0
    %1215 = vmatpush.bf16.msra.mxu0 0
    %1216 = vmatpush.bf16.msra.mxu0 %v1204
    %1217 = vmatpush.bf16.msra.mxu0 %v1203
    %1218 = vmatmul.bf16.gmra.mxu0 %v1208
    %v1219 = vpop.f32.mrf.mxu0
    %v1220 = vadd.f32 %v1193, %v1219
    %v1221 = vpop.f32.mrf.mxu0
    %v1222 = vadd.f32 %v1193, %v1221
    %1223 = vdwg.mxu0
    %v1224 = vmul.f32 %v1220, 1.702
    %v1225 = vmul.f32 %v1222, 1.702
    %v1226 = vxor.u32 %v1224, 2147483648
    %v1227 = vxor.u32 %v1225, 2147483648
    %v1228 = vmul.f32 %v1226, 1.442695
    %v1229 = vpow.pop %v1228
    %v1230 = vmul.f32 %v1227, 1.442695
    %v1231 = vpow.pop %v1230
    %v1232 = vadd.f32 %v1229, 1.0
    %v1233 = vadd.f32 %v1231, 1.0
    %v1234 = vrcp.pop %v1232
    %v1235 = vmul.f32 %v1232, %v1234
    %v1236 = vsub.f32 1.0, %v1235
    %v1237 = vmul.f32 %v1234, %v1236
    %v1238 = vadd.f32 %v1234, %v1237
    %vm1239 = vweird.f32 %v1232
    %vm1240 = vweird.f32 %v1234
    %vm1241 = vmor %vm1239, %vm1240
    %v1242 = vsel %vm1241, %v1234, %v1238
    %v1243 = vand.u32 2147483647, %v1232
    %vm1244 = vcmp.eq.f32.partialorder %v1243, 8.507059e+37
    %v1245 = vand.u32 %v1232, 2147483648
    %v1246 = vor.u32 1.1754944e-38, %v1245
    %v1247 = vsel %vm1244, %v1246, %v1242
    %v1248 = vmul.f32 1.0, %v1247
    %v1249 = vrcp.pop %v1233
    %v1250 = vmul.f32 %v1233, %v1249
    %v1251 = vsub.f32 1.0, %v1250
    %v1252 = vmul.f32 %v1249, %v1251
    %v1253 = vadd.f32 %v1249, %v1252
    %vm1254 = vweird.f32 %v1233
    %vm1255 = vweird.f32 %v1249
    %vm1256 = vmor %vm1254, %vm1255
    %v1257 = vsel %vm1256, %v1249, %v1253
    %v1258 = vand.u32 2147483647, %v1233
    %vm1259 = vcmp.eq.f32.partialorder %v1258, 8.507059e+37
    %v1260 = vand.u32 %v1233, 2147483648
    %v1261 = vor.u32 1.1754944e-38, %v1260
    %v1262 = vsel %vm1259, %v1261, %v1257
    %v1263 = vmul.f32 1.0, %v1262
    %v1264 = vmul.f32 %v1220, %v1248
    %v1265 = vmul.f32 %v1222, %v1263
    %v1266 = vpack.c.bf16 %v1265, %v1264
    %v1267 = vld [vmem:[%s10] sm:$0xf]
    %v1268 = vld [vmem:[%s10 + $0x4] sm:$0xf]
    %v1269 = vld [vmem:[%s10 + $0x8] sm:$0xf]
    %v1270 = vld [vmem:[%s10 + $0xc] sm:$0xf]
    %v1271 = vld [vmem:[%s10 + $0x10] sm:$0xf]
    %v1272 = vld [vmem:[%s10 + $0x14] sm:$0xf]
    %v1273 = vld [vmem:[%s10 + $0x18] sm:$0xf]
    %v1274 = vld [vmem:[%s10 + $0x1c] sm:$0xf]
    %v1283 = vunpack.c.l.b16 %v1267
    %v1284 = vunpack.c.l.b16 %v1268
    %v1285 = vunpack.c.l.b16 %v1269
    %v1286 = vunpack.c.l.b16 %v1270
    %v1287 = vunpack.c.l.b16 %v1271
    %v1288 = vunpack.c.l.b16 %v1272
    %v1289 = vunpack.c.l.b16 %v1273
    %v1290 = vunpack.c.l.b16 %v1274
    %v1291 = vpack.c.b16 %v1284, %v1283
    %v1292 = vpack.c.b16 %v1286, %v1285
    %v1293 = vpack.c.b16 %v1288, %v1287
    %v1294 = vpack.c.b16 %v1290, %v1289
    %vm1299 = vcmask 523264
    %v1301 = vsel %vm1299, %v1266, 0
    %1303 = vmatpush.bf16.msra.mxu0 0
    %1304 = vmatpush.bf16.msra.mxu0 0
    %1305 = vmatpush.bf16.msra.mxu0 0
    %1306 = vmatpush.bf16.msra.mxu0 0
    %1307 = vmatpush.bf16.msra.mxu0 %v1294
    %1308 = vmatpush.bf16.msra.mxu0 %v1293
    %1309 = vmatpush.bf16.msra.mxu0 %v1292
    %1310 = vmatpush.bf16.msra.mxu0 %v1291
    %1311 = vmatmul.bf16.gmra.mxu0 %v1301
    %v1312 = vpop.f32.mrf.mxu0
    %v1313 = vadd.f32 0.0, %v1312
    %v1314 = vpop.f32.mrf.mxu0
    %v1315 = vadd.f32 0.0, %v1314
    %1316 = vdwg.mxu0
    %v1317 = vadd.f32 %v1140, %v1313
    %v1318 = vadd.f32 %v1141, %v1315
    %v1319 = vld [vmem:[%s11] sm:$0x1]
    %v1321 = vperm.slane %v1319, 0
    %v1323 = vadd.f32 %v1317, %v1321
    %v1324 = vadd.f32 %v1318, %v1321
    %v1325 = vsel %vm129, %v1323, 0.0
    %1326 = vadd.xlane.f32.xlu0 %v1325
    %v1327 = vpop.xlane.xlu0 %1326
    %v1328 = vsel %vm133, %v1324, 0.0
    %1329 = vadd.xlane.f32.xlu0 %v1328
    %v1330 = vpop.xlane.xlu0 %1329
    %v1331 = vmul.f32 %v1327, %v143
    %v1332 = vmul.f32 %v1330, %v143
    %v1333 = vsub.f32 %v1323, %v1331
    %v1334 = vsub.f32 %v1324, %v1332
    %v1335 = vmul.f32 %v1333, %v1333
    %v1336 = vmul.f32 %v1334, %v1334
    %v1337 = vsel %vm129, %v1335, 0.0
    %1338 = vadd.xlane.f32.xlu0 %v1337
    %v1339 = vpop.xlane.xlu0 %1338
    %v1340 = vsel %vm133, %v1336, 0.0
    %1341 = vadd.xlane.f32.xlu0 %v1340
    %v1342 = vpop.xlane.xlu0 %1341
    %v1343 = vmul.f32 %v1339, %v143
    %v1344 = vmul.f32 %v1342, %v143
    %v1345 = vadd.f32 %v1343, 1e-05
    %v1346 = vadd.f32 %v1344, 1e-05
    %v1347 = vrsqrt.pop %v1345
    %v1348 = vmul.f32 %v1347, %v1345
    %v1349 = vmul.f32 %v1348, %v1347
    %v1350 = vmul.f32 0.5, %v1349
    %v1351 = vsub.f32 1.5, %v1350
    %v1352 = vmul.f32 %v1347, %v1351
    %vm1353 = vweird.f32 %v1345
    %vm1354 = vweird.f32 %v1347
    %vm1355 = vmor %vm1353, %vm1354
    %v1356 = vsel %vm1355, %v1347, %v1352
    %v1357 = vrsqrt.pop %v1346
    %v1358 = vmul.f32 %v1357, %v1346
    %v1359 = vmul.f32 %v1358, %v1357
    %v1360 = vmul.f32 0.5, %v1359
    %v1361 = vsub.f32 1.5, %v1360
    %v1362 = vmul.f32 %v1357, %v1361
    %vm1363 = vweird.f32 %v1346
    %vm1364 = vweird.f32 %v1357
    %vm1365 = vmor %vm1363, %vm1364
    %v1366 = vsel %vm1365, %v1357, %v1362
    %v1367 = vmul.f32 %v1333, %v1356
    %v1368 = vmul.f32 %v1334, %v1366
    %v1369 = vpack.c.bf16 %v1368, %v1367
    %s1370 = scalar_lea.vmem %s4, 16
    %v1371 = vld [vmem:[%s1370] sm:$0xf]
    %v1372 = vld [vmem:[%s1370 + $0x4] sm:$0xf]
    %v1373 = vld [vmem:[%s1370 + $0x8] sm:$0xf]
    %v1374 = vld [vmem:[%s1370 + $0xc] sm:$0xf]
    %s1375 = scalar_lea.vmem %s5, 1
    %v1376 = vld [vmem:[%s1375] sm:$0x1]
    %v1378 = vperm.slane %v1376, 0
    %v1384 = vunpack.c.l.b16 %v1371
    %v1385 = vunpack.c.l.b16 %v1372
    %v1386 = vunpack.c.l.b16 %v1373
    %v1387 = vunpack.c.l.b16 %v1374
    %v1388 = vpack.c.b16 %v1385, %v1384
    %v1389 = vpack.c.b16 %v1387, %v1386
    %v1393 = vsel %vm129, %v1369, 0
    %1395 = vmatpush.bf16.msra.mxu0 0
    %1396 = vmatpush.bf16.msra.mxu0 0
    %1397 = vmatpush.bf16.msra.mxu0 0
    %1398 = vmatpush.bf16.msra.mxu0 0
    %1399 = vmatpush.bf16.msra.mxu0 0
    %1400 = vmatpush.bf16.msra.mxu0 0
    %1401 = vmatpush.bf16.msra.mxu0 %v1389
    %1402 = vmatpush.bf16.msra.mxu0 %v1388
    %1403 = vmatmul.bf16.gmra.mxu0 %v1393
    %v1404 = vpop.f32.mrf.mxu0
    %v1405 = vadd.f32 %v1378, %v1404
    %v1406 = vpop.f32.mrf.mxu0
    %v1407 = vadd.f32 %v1378, %v1406
    %1408 = vdwg.mxu0
    %v1411 = vrot.slane %v1405, 1
    %v1412 = vrot.slane %v1405, 2
    %v1413 = vrot.slane %v1405, 3
    %v1414 = vrot.slane %v1405, 4
    %v1415 = vrot.slane %v1405, 5
    %v1416 = vrot.slane %v1405, 6
    %v1417 = vrot.slane %v1405, 7
    %v1418 = vrot.slane %v1407, 1
    %1419 = vrot.lane.b32.xlu0 %v1405, 120
    %v1420 = vpop.permute.xlu0 %1419
    %1421 = vrot.lane.b32.xlu0 %v1411, 120
    %v1422 = vpop.permute.xlu0 %1421
    %1423 = vrot.lane.b32.xlu0 %v1412, 120
    %v1424 = vpop.permute.xlu0 %1423
    %1425 = vrot.lane.b32.xlu0 %v1413, 120
    %v1426 = vpop.permute.xlu0 %1425
    %1427 = vrot.lane.b32.xlu0 %v1414, 120
    %v1428 = vpop.permute.xlu0 %1427
    %1429 = vrot.lane.b32.xlu0 %v1415, 120
    %v1430 = vpop.permute.xlu0 %1429
    %1431 = vrot.lane.b32.xlu0 %v1416, 120
    %v1432 = vpop.permute.xlu0 %1431
    %1433 = vrot.lane.b32.xlu0 %v1417, 120
    %v1434 = vpop.permute.xlu0 %1433
    %1435 = vrot.lane.b32.xlu0 %v1407, 120
    %v1436 = vpop.permute.xlu0 %1435
    %1437 = vrot.lane.b32.xlu0 %v1418, 120
    %v1438 = vpop.permute.xlu0 %1437
    %1439 = vrot.lane.b32.xlu0 %v1405, 112
    %v1440 = vpop.permute.xlu0 %1439
    %1441 = vrot.lane.b32.xlu0 %v1411, 112
    %v1442 = vpop.permute.xlu0 %1441
    %1443 = vrot.lane.b32.xlu0 %v1412, 112
    %v1444 = vpop.permute.xlu0 %1443
    %1445 = vrot.lane.b32.xlu0 %v1413, 112
    %v1446 = vpop.permute.xlu0 %1445
    %1447 = vrot.lane.b32.xlu0 %v1414, 112
    %v1448 = vpop.permute.xlu0 %1447
    %1449 = vrot.lane.b32.xlu0 %v1415, 112
    %v1450 = vpop.permute.xlu0 %1449
    %1451 = vrot.lane.b32.xlu0 %v1416, 112
    %v1452 = vpop.permute.xlu0 %1451
    %1453 = vrot.lane.b32.xlu0 %v1417, 112
    %v1454 = vpop.permute.xlu0 %1453
    %1455 = vrot.lane.b32.xlu0 %v1407, 112
    %v1456 = vpop.permute.xlu0 %1455
    %1457 = vrot.lane.b32.xlu0 %v1418, 112
    %v1458 = vpop.permute.xlu0 %1457
    %1459 = vrot.lane.b32.xlu0 %v1405, 104
    %v1460 = vpop.permute.xlu0 %1459
    %1461 = vrot.lane.b32.xlu0 %v1411, 104
    %v1462 = vpop.permute.xlu0 %1461
    %1463 = vrot.lane.b32.xlu0 %v1412, 104
    %v1464 = vpop.permute.xlu0 %1463
    %1465 = vrot.lane.b32.xlu0 %v1413, 104
    %v1466 = vpop.permute.xlu0 %1465
    %1467 = vrot.lane.b32.xlu0 %v1414, 104
    %v1468 = vpop.permute.xlu0 %1467
    %1469 = vrot.lane.b32.xlu0 %v1415, 104
    %v1470 = vpop.permute.xlu0 %1469
    %1471 = vrot.lane.b32.xlu0 %v1416, 104
    %v1472 = vpop.permute.xlu0 %1471
    %1473 = vrot.lane.b32.xlu0 %v1417, 104
    %v1474 = vpop.permute.xlu0 %1473
    %1475 = vrot.lane.b32.xlu0 %v1407, 104
    %v1476 = vpop.permute.xlu0 %1475
    %1477 = vrot.lane.b32.xlu0 %v1418, 104
    %v1478 = vpop.permute.xlu0 %1477
    %1479 = vst [vmem:[#allocation1] ss:$9 sm:$0xff] %v1405
    %s1480 = scalar_lea.vmem [#allocation1], 1
    %1481 = vst [vmem:[%s1480] ss:$9 sm:$0xff] %v1411
    %s1482 = scalar_lea.vmem [#allocation1], 2
    %1483 = vst [vmem:[%s1482] ss:$9 sm:$0xff] %v1412
    %s1484 = scalar_lea.vmem [#allocation1], 3
    %1485 = vst [vmem:[%s1484] ss:$9 sm:$0xff] %v1413
    %s1486 = scalar_lea.vmem [#allocation1], 4
    %1487 = vst [vmem:[%s1486] ss:$9 sm:$0xff] %v1414
    %v1488 = vld [vmem:[#allocation1] sm:$0xff]
    %1489 = vst [vmem:[#allocation1] ss:$9 sm:$0xff] %v1415
    %1490 = vst [vmem:[%s1480] ss:$9 sm:$0xff] %v1416
    %1491 = vst [vmem:[%s1482] ss:$9 sm:$0xff] %v1417
    %1492 = vst [vmem:[%s1484] ss:$9 sm:$0xff] %v1407
    %1493 = vst [vmem:[%s1486] ss:$9 sm:$0xff] %v1418
    %v1494 = vld [vmem:[#allocation1] sm:$0xff]
    %1495 = vst [vmem:[#allocation1] ss:$9 sm:$0xff] %v1420
    %1496 = vst [vmem:[%s1480] ss:$9 sm:$0xff] %v1422
    %1497 = vst [vmem:[%s1482] ss:$9 sm:$0xff] %v1424
    %1498 = vst [vmem:[%s1484] ss:$9 sm:$0xff] %v1426
    %1499 = vst [vmem:[%s1486] ss:$9 sm:$0xff] %v1428
    %v1500 = vld [vmem:[#allocation1] sm:$0xff]
    %1501 = vst [vmem:[#allocation1] ss:$9 sm:$0xff] %v1430
    %1502 = vst [vmem:[%s1480] ss:$9 sm:$0xff] %v1432
    %1503 = vst [vmem:[%s1482] ss:$9 sm:$0xff] %v1434
    %1504 = vst [vmem:[%s1484] ss:$9 sm:$0xff] %v1436
    %1505 = vst [vmem:[%s1486] ss:$9 sm:$0xff] %v1438
    %v1506 = vld [vmem:[#allocation1] sm:$0xff]
    %1507 = vst [vmem:[#allocation1] ss:$9 sm:$0xff] %v1440
    %1508 = vst [vmem:[%s1480] ss:$9 sm:$0xff] %v1442
    %1509 = vst [vmem:[%s1482] ss:$9 sm:$0xff] %v1444
    %1510 = vst [vmem:[%s1484] ss:$9 sm:$0xff] %v1446
    %1511 = vst [vmem:[%s1486] ss:$9 sm:$0xff] %v1448
    %v1512 = vld [vmem:[#allocation1] sm:$0xff]
    %1513 = vst [vmem:[#allocation1] ss:$9 sm:$0xff] %v1450
    %1514 = vst [vmem:[%s1480] ss:$9 sm:$0xff] %v1452
    %1515 = vst [vmem:[%s1482] ss:$9 sm:$0xff] %v1454
    %1516 = vst [vmem:[%s1484] ss:$9 sm:$0xff] %v1456
    %1517 = vst [vmem:[%s1486] ss:$9 sm:$0xff] %v1458
    %v1518 = vld [vmem:[#allocation1] sm:$0xff]
    %1519 = vst [vmem:[#allocation1] ss:$9 sm:$0xff] %v1460
    %1520 = vst [vmem:[%s1480] ss:$9 sm:$0xff] %v1462
    %1521 = vst [vmem:[%s1482] ss:$9 sm:$0xff] %v1464
    %1522 = vst [vmem:[%s1484] ss:$9 sm:$0xff] %v1466
    %1523 = vst [vmem:[%s1486] ss:$9 sm:$0xff] %v1468
    %v1524 = vld [vmem:[#allocation1] sm:$0xff]
    %1525 = vst [vmem:[#allocation1] ss:$9 sm:$0xff] %v1470
    %1526 = vst [vmem:[%s1480] ss:$9 sm:$0xff] %v1472
    %1527 = vst [vmem:[%s1482] ss:$9 sm:$0xff] %v1474
    %1528 = vst [vmem:[%s1484] ss:$9 sm:$0xff] %v1476
    %1529 = vst [vmem:[%s1486] ss:$9 sm:$0xff] %v1478
    %v1530 = vld [vmem:[#allocation1] sm:$0xff]
    %v1539 = vpack.c.bf16 %v1488, %v1488
    %v1540 = vpack.c.bf16 %v1494, %v1494
    %v1541 = vpack.c.bf16 %v1500, %v1500
    %v1542 = vpack.c.bf16 %v1506, %v1506
    %v1543 = vpack.c.bf16 %v1512, %v1512
    %v1544 = vpack.c.bf16 %v1518, %v1518
    %v1545 = vpack.c.bf16 %v1524, %v1524
    %v1546 = vpack.c.bf16 %v1530, %v1530
    %1547 = vst [vmem:[#allocation1] ss:$9 sm:$0xff] %v1405
    %s1548 = scalar_lea.vmem [#allocation1], 1
    %1549 = vst [vmem:[%s1548] ss:$9 sm:$0xff] %v1411
    %s1550 = scalar_lea.vmem [#allocation1], 2
    %1551 = vst [vmem:[%s1550] ss:$9 sm:$0xff] %v1412
    %s1552 = scalar_lea.vmem [#allocation1], 3
    %1553 = vst [vmem:[%s1552] ss:$9 sm:$0xff] %v1413
    %s1554 = scalar_lea.vmem [#allocation1], 4
    %1555 = vst [vmem:[%s1554] ss:$9 sm:$0xff] %v1414
    %v1556 = vld [vmem:[#allocation1] sm:$0xff]
    %1557 = vst [vmem:[#allocation1] ss:$9 sm:$0xff] %v1415
    %1558 = vst [vmem:[%s1548] ss:$9 sm:$0xff] %v1416
    %1559 = vst [vmem:[%s1550] ss:$9 sm:$0xff] %v1417
    %1560 = vst [vmem:[%s1552] ss:$9 sm:$0xff] %v1407
    %1561 = vst [vmem:[%s1554] ss:$9 sm:$0xff] %v1418
    %v1562 = vld [vmem:[#allocation1] sm:$0xff]
    %1563 = vst [vmem:[#allocation1] ss:$9 sm:$0xff] %v1420
    %1564 = vst [vmem:[%s1548] ss:$9 sm:$0xff] %v1422
    %1565 = vst [vmem:[%s1550] ss:$9 sm:$0xff] %v1424
    %1566 = vst [vmem:[%s1552] ss:$9 sm:$0xff] %v1426
    %1567 = vst [vmem:[%s1554] ss:$9 sm:$0xff] %v1428
    %v1568 = vld [vmem:[#allocation1] sm:$0xff]
    %1569 = vst [vmem:[#allocation1] ss:$9 sm:$0xff] %v1430
    %1570 = vst [vmem:[%s1548] ss:$9 sm:$0xff] %v1432
    %1571 = vst [vmem:[%s1550] ss:$9 sm:$0xff] %v1434
    %1572 = vst [vmem:[%s1552] ss:$9 sm:$0xff] %v1436
    %1573 = vst [vmem:[%s1554] ss:$9 sm:$0xff] %v1438
    %v1574 = vld [vmem:[#allocation1] sm:$0xff]
    %1575 = vst [vmem:[#allocation1] ss:$9 sm:$0xff] %v1440
    %1576 = vst [vmem:[%s1548] ss:$9 sm:$0xff] %v1442
    %1577 = vst [vmem:[%s1550] ss:$9 sm:$0xff] %v1444
    %1578 = vst [vmem:[%s1552] ss:$9 sm:$0xff] %v1446
    %1579 = vst [vmem:[%s1554] ss:$9 sm:$0xff] %v1448
    %v1580 = vld [vmem:[#allocation1] sm:$0xff]
    %1581 = vst [vmem:[#allocation1] ss:$9 sm:$0xff] %v1450
    %1582 = vst [vmem:[%s1548] ss:$9 sm:$0xff] %v1452
    %1583 = vst [vmem:[%s1550] ss:$9 sm:$0xff] %v1454
    %1584 = vst [vmem:[%s1552] ss:$9 sm:$0xff] %v1456
    %1585 = vst [vmem:[%s1554] ss:$9 sm:$0xff] %v1458
    %v1586 = vld [vmem:[#allocation1] sm:$0xff]
    %1587 = vst [vmem:[#allocation1] ss:$9 sm:$0xff] %v1460
    %1588 = vst [vmem:[%s1548] ss:$9 sm:$0xff] %v1462
    %1589 = vst [vmem:[%s1550] ss:$9 sm:$0xff] %v1464
    %1590 = vst [vmem:[%s1552] ss:$9 sm:$0xff] %v1466
    %1591 = vst [vmem:[%s1554] ss:$9 sm:$0xff] %v1468
    %v1592 = vld [vmem:[#allocation1] sm:$0xff]
    %1593 = vst [vmem:[#allocation1] ss:$9 sm:$0xff] %v1470
    %1594 = vst [vmem:[%s1548] ss:$9 sm:$0xff] %v1472
    %1595 = vst [vmem:[%s1550] ss:$9 sm:$0xff] %v1474
    %1596 = vst [vmem:[%s1552] ss:$9 sm:$0xff] %v1476
    %1597 = vst [vmem:[%s1554] ss:$9 sm:$0xff] %v1478
    %v1598 = vld [vmem:[#allocation1] sm:$0xff]
    %v1607 = vpack.c.bf16 %v1556, %v1556
    %v1608 = vpack.c.bf16 %v1562, %v1562
    %v1609 = vpack.c.bf16 %v1568, %v1568
    %v1610 = vpack.c.bf16 %v1574, %v1574
    %v1611 = vpack.c.bf16 %v1580, %v1580
    %v1612 = vpack.c.bf16 %v1586, %v1586
    %v1613 = vpack.c.bf16 %v1592, %v1592
    %v1614 = vpack.c.bf16 %v1598, %v1598
    %v1616 = vunpack.c.l.b16 %v1607
    %v1617 = vpack.c.b16 %v1616, %v1616
    %1618 = vrot.lane.b32.xlu0 %v1617, 96
    %v1619 = vpop.permute.xlu0 %1618
    %v1621 = vsel %vm487, %v1539, 0
    %v1624 = vsel %vm487, %v1619, 0
    %1626 = vmatpush.bf16.xpose.msra.mxu0 0
    %1627 = vmatpush.bf16.xpose.msra.mxu0 0
    %1628 = vmatpush.bf16.xpose.msra.mxu0 0
    %1629 = vmatpush.bf16.xpose.msra.mxu0 0
    %1630 = vmatpush.bf16.xpose.msra.mxu0 0
    %1631 = vmatpush.bf16.xpose.msra.mxu0 0
    %1632 = vmatpush.bf16.xpose.msra.mxu0 0
    %1633 = vmatpush.bf16.xpose.msra.mxu0 %v1624
    %1634 = vmatmul.bf16.gmra.mxu0 %v1621
    %v1635 = vpop.f32.mrf.mxu0
    %v1636 = vadd.f32 0.0, %v1635
    %v1637 = vpop.f32.mrf.mxu0
    %1638 = vdwg.mxu0
    %v1640 = vunpack.c.l.b16 %v1608
    %v1641 = vpack.c.b16 %v1640, %v1640
    %1642 = vrot.lane.b32.xlu0 %v1641, 96
    %v1643 = vpop.permute.xlu0 %1642
    %v1645 = vsel %vm487, %v1540, 0
    %v1648 = vsel %vm487, %v1643, 0
    %1650 = vmatpush.bf16.xpose.msra.mxu0 0
    %1651 = vmatpush.bf16.xpose.msra.mxu0 0
    %1652 = vmatpush.bf16.xpose.msra.mxu0 0
    %1653 = vmatpush.bf16.xpose.msra.mxu0 0
    %1654 = vmatpush.bf16.xpose.msra.mxu0 0
    %1655 = vmatpush.bf16.xpose.msra.mxu0 0
    %1656 = vmatpush.bf16.xpose.msra.mxu0 0
    %1657 = vmatpush.bf16.xpose.msra.mxu0 %v1648
    %1658 = vmatmul.bf16.gmra.mxu0 %v1645
    %v1659 = vpop.f32.mrf.mxu0
    %v1660 = vadd.f32 0.0, %v1659
    %v1661 = vpop.f32.mrf.mxu0
    %1662 = vdwg.mxu0
    %v1664 = vunpack.c.l.b16 %v1609
    %v1665 = vpack.c.b16 %v1664, %v1664
    %1666 = vrot.lane.b32.xlu0 %v1665, 96
    %v1667 = vpop.permute.xlu0 %1666
    %v1669 = vsel %vm487, %v1541, 0
    %v1672 = vsel %vm487, %v1667, 0
    %1674 = vmatpush.bf16.xpose.msra.mxu0 0
    %1675 = vmatpush.bf16.xpose.msra.mxu0 0
    %1676 = vmatpush.bf16.xpose.msra.mxu0 0
    %1677 = vmatpush.bf16.xpose.msra.mxu0 0
    %1678 = vmatpush.bf16.xpose.msra.mxu0 0
    %1679 = vmatpush.bf16.xpose.msra.mxu0 0
    %1680 = vmatpush.bf16.xpose.msra.mxu0 0
    %1681 = vmatpush.bf16.xpose.msra.mxu0 %v1672
    %1682 = vmatmul.bf16.gmra.mxu0 %v1669
    %v1683 = vpop.f32.mrf.mxu0
    %v1684 = vadd.f32 0.0, %v1683
    %v1685 = vpop.f32.mrf.mxu0
    %1686 = vdwg.mxu0
    %v1688 = vunpack.c.l.b16 %v1610
    %v1689 = vpack.c.b16 %v1688, %v1688
    %1690 = vrot.lane.b32.xlu0 %v1689, 96
    %v1691 = vpop.permute.xlu0 %1690
    %v1693 = vsel %vm487, %v1542, 0
    %v1696 = vsel %vm487, %v1691, 0
    %1698 = vmatpush.bf16.xpose.msra.mxu0 0
    %1699 = vmatpush.bf16.xpose.msra.mxu0 0
    %1700 = vmatpush.bf16.xpose.msra.mxu0 0
    %1701 = vmatpush.bf16.xpose.msra.mxu0 0
    %1702 = vmatpush.bf16.xpose.msra.mxu0 0
    %1703 = vmatpush.bf16.xpose.msra.mxu0 0
    %1704 = vmatpush.bf16.xpose.msra.mxu0 0
    %1705 = vmatpush.bf16.xpose.msra.mxu0 %v1696
    %1706 = vmatmul.bf16.gmra.mxu0 %v1693
    %v1707 = vpop.f32.mrf.mxu0
    %v1708 = vadd.f32 0.0, %v1707
    %v1709 = vpop.f32.mrf.mxu0
    %1710 = vdwg.mxu0
    %v1712 = vunpack.c.l.b16 %v1611
    %v1713 = vpack.c.b16 %v1712, %v1712
    %1714 = vrot.lane.b32.xlu0 %v1713, 96
    %v1715 = vpop.permute.xlu0 %1714
    %v1717 = vsel %vm487, %v1543, 0
    %v1720 = vsel %vm487, %v1715, 0
    %1722 = vmatpush.bf16.xpose.msra.mxu0 0
    %1723 = vmatpush.bf16.xpose.msra.mxu0 0
    %1724 = vmatpush.bf16.xpose.msra.mxu0 0
    %1725 = vmatpush.bf16.xpose.msra.mxu0 0
    %1726 = vmatpush.bf16.xpose.msra.mxu0 0
    %1727 = vmatpush.bf16.xpose.msra.mxu0 0
    %1728 = vmatpush.bf16.xpose.msra.mxu0 0
    %1729 = vmatpush.bf16.xpose.msra.mxu0 %v1720
    %1730 = vmatmul.bf16.gmra.mxu0 %v1717
    %v1731 = vpop.f32.mrf.mxu0
    %v1732 = vadd.f32 0.0, %v1731
    %v1733 = vpop.f32.mrf.mxu0
    %1734 = vdwg.mxu0
    %v1736 = vunpack.c.l.b16 %v1612
    %v1737 = vpack.c.b16 %v1736, %v1736
    %1738 = vrot.lane.b32.xlu0 %v1737, 96
    %v1739 = vpop.permute.xlu0 %1738
    %v1741 = vsel %vm487, %v1544, 0
    %v1744 = vsel %vm487, %v1739, 0
    %1746 = vmatpush.bf16.xpose.msra.mxu0 0
    %1747 = vmatpush.bf16.xpose.msra.mxu0 0
    %1748 = vmatpush.bf16.xpose.msra.mxu0 0
    %1749 = vmatpush.bf16.xpose.msra.mxu0 0
    %1750 = vmatpush.bf16.xpose.msra.mxu0 0
    %1751 = vmatpush.bf16.xpose.msra.mxu0 0
    %1752 = vmatpush.bf16.xpose.msra.mxu0 0
    %1753 = vmatpush.bf16.xpose.msra.mxu0 %v1744
    %1754 = vmatmul.bf16.gmra.mxu0 %v1741
    %v1755 = vpop.f32.mrf.mxu0
    %v1756 = vadd.f32 0.0, %v1755
    %v1757 = vpop.f32.mrf.mxu0
    %1758 = vdwg.mxu0
    %v1760 = vunpack.c.l.b16 %v1613
    %v1761 = vpack.c.b16 %v1760, %v1760
    %1762 = vrot.lane.b32.xlu0 %v1761, 96
    %v1763 = vpop.permute.xlu0 %1762
    %v1765 = vsel %vm487, %v1545, 0
    %v1768 = vsel %vm487, %v1763, 0
    %1770 = vmatpush.bf16.xpose.msra.mxu0 0
    %1771 = vmatpush.bf16.xpose.msra.mxu0 0
    %1772 = vmatpush.bf16.xpose.msra.mxu0 0
    %1773 = vmatpush.bf16.xpose.msra.mxu0 0
    %1774 = vmatpush.bf16.xpose.msra.mxu0 0
    %1775 = vmatpush.bf16.xpose.msra.mxu0 0
    %1776 = vmatpush.bf16.xpose.msra.mxu0 0
    %1777 = vmatpush.bf16.xpose.msra.mxu0 %v1768
    %1778 = vmatmul.bf16.gmra.mxu0 %v1765
    %v1779 = vpop.f32.mrf.mxu0
    %v1780 = vadd.f32 0.0, %v1779
    %v1781 = vpop.f32.mrf.mxu0
    %1782 = vdwg.mxu0
    %v1784 = vunpack.c.l.b16 %v1614
    %v1785 = vpack.c.b16 %v1784, %v1784
    %1786 = vrot.lane.b32.xlu0 %v1785, 96
    %v1787 = vpop.permute.xlu0 %1786
    %v1789 = vsel %vm487, %v1546, 0
    %v1792 = vsel %vm487, %v1787, 0
    %1794 = vmatpush.bf16.xpose.msra.mxu0 0
    %1795 = vmatpush.bf16.xpose.msra.mxu0 0
    %1796 = vmatpush.bf16.xpose.msra.mxu0 0
    %1797 = vmatpush.bf16.xpose.msra.mxu0 0
    %1798 = vmatpush.bf16.xpose.msra.mxu0 0
    %1799 = vmatpush.bf16.xpose.msra.mxu0 0
    %1800 = vmatpush.bf16.xpose.msra.mxu0 0
    %1801 = vmatpush.bf16.xpose.msra.mxu0 %v1792
    %1802 = vmatmul.bf16.gmra.mxu0 %v1789
    %v1803 = vpop.f32.mrf.mxu0
    %v1804 = vadd.f32 0.0, %v1803
    %v1805 = vpop.f32.mrf.mxu0
    %1806 = vdwg.mxu0
    %v1807 = vsel %vm675, %v1636, -inf
    %1808 = vmax.xlane.f32.xlu0 %v1807
    %v1809 = vpop.xlane.xlu0 %1808
    %v1810 = vsel %vm675, %v1660, -inf
    %1811 = vmax.xlane.f32.xlu0 %v1810
    %v1812 = vpop.xlane.xlu0 %1811
    %v1813 = vsel %vm675, %v1684, -inf
    %1814 = vmax.xlane.f32.xlu0 %v1813
    %v1815 = vpop.xlane.xlu0 %1814
    %v1816 = vsel %vm675, %v1708, -inf
    %1817 = vmax.xlane.f32.xlu0 %v1816
    %v1818 = vpop.xlane.xlu0 %1817
    %v1819 = vsel %vm675, %v1732, -inf
    %1820 = vmax.xlane.f32.xlu0 %v1819
    %v1821 = vpop.xlane.xlu0 %1820
    %v1822 = vsel %vm675, %v1756, -inf
    %1823 = vmax.xlane.f32.xlu0 %v1822
    %v1824 = vpop.xlane.xlu0 %1823
    %v1825 = vsel %vm675, %v1780, -inf
    %1826 = vmax.xlane.f32.xlu0 %v1825
    %v1827 = vpop.xlane.xlu0 %1826
    %v1828 = vsel %vm675, %v1804, -inf
    %1829 = vmax.xlane.f32.xlu0 %v1828
    %v1830 = vpop.xlane.xlu0 %1829
    %v1831 = vsub.f32 %v1636, %v1809
    %v1832 = vsub.f32 %v1660, %v1812
    %v1833 = vsub.f32 %v1684, %v1815
    %v1834 = vsub.f32 %v1708, %v1818
    %v1835 = vsub.f32 %v1732, %v1821
    %v1836 = vsub.f32 %v1756, %v1824
    %v1837 = vsub.f32 %v1780, %v1827
    %v1838 = vsub.f32 %v1804, %v1830
    %v1839 = vmul.f32 %v1831, 1.442695
    %v1840 = vpow.pop %v1839
    %v1841 = vmul.f32 %v1832, 1.442695
    %v1842 = vpow.pop %v1841
    %v1843 = vmul.f32 %v1833, 1.442695
    %v1844 = vpow.pop %v1843
    %v1845 = vmul.f32 %v1834, 1.442695
    %v1846 = vpow.pop %v1845
    %v1847 = vmul.f32 %v1835, 1.442695
    %v1848 = vpow.pop %v1847
    %v1849 = vmul.f32 %v1836, 1.442695
    %v1850 = vpow.pop %v1849
    %v1851 = vmul.f32 %v1837, 1.442695
    %v1852 = vpow.pop %v1851
    %v1853 = vmul.f32 %v1838, 1.442695
    %v1854 = vpow.pop %v1853
    %v1855 = vsel %vm675, %v1840, 0.0
    %1856 = vadd.xlane.f32.xlu0 %v1855
    %v1857 = vpop.xlane.xlu0 %1856
    %v1858 = vsel %vm675, %v1842, 0.0
    %1859 = vadd.xlane.f32.xlu0 %v1858
    %v1860 = vpop.xlane.xlu0 %1859
    %v1861 = vsel %vm675, %v1844, 0.0
    %1862 = vadd.xlane.f32.xlu0 %v1861
    %v1863 = vpop.xlane.xlu0 %1862
    %v1864 = vsel %vm675, %v1846, 0.0
    %1865 = vadd.xlane.f32.xlu0 %v1864
    %v1866 = vpop.xlane.xlu0 %1865
    %v1867 = vsel %vm675, %v1848, 0.0
    %1868 = vadd.xlane.f32.xlu0 %v1867
    %v1869 = vpop.xlane.xlu0 %1868
    %v1870 = vsel %vm675, %v1850, 0.0
    %1871 = vadd.xlane.f32.xlu0 %v1870
    %v1872 = vpop.xlane.xlu0 %1871
    %v1873 = vsel %vm675, %v1852, 0.0
    %1874 = vadd.xlane.f32.xlu0 %v1873
    %v1875 = vpop.xlane.xlu0 %1874
    %v1876 = vsel %vm675, %v1854, 0.0
    %1877 = vadd.xlane.f32.xlu0 %v1876
    %v1878 = vpop.xlane.xlu0 %1877
    %v1879 = vrcp.pop %v1857
    %v1880 = vrcp.pop %v1860
    %v1881 = vrcp.pop %v1863
    %v1882 = vrcp.pop %v1866
    %v1883 = vrcp.pop %v1869
    %v1884 = vrcp.pop %v1872
    %v1885 = vrcp.pop %v1875
    %v1886 = vrcp.pop %v1878
    %v1887 = vmul.f32 %v1840, %v1879
    %v1888 = vmul.f32 %v1842, %v1880
    %v1889 = vmul.f32 %v1844, %v1881
    %v1890 = vmul.f32 %v1846, %v1882
    %v1891 = vmul.f32 %v1848, %v1883
    %v1892 = vmul.f32 %v1850, %v1884
    %v1893 = vmul.f32 %v1852, %v1885
    %v1894 = vmul.f32 %v1854, %v1886
    %v1895 = vpack.c.bf16 %v1887, %v1887
    %v1896 = vpack.c.bf16 %v1888, %v1888
    %v1897 = vpack.c.bf16 %v1889, %v1889
    %v1898 = vpack.c.bf16 %v1890, %v1890
    %v1899 = vpack.c.bf16 %v1891, %v1891
    %v1900 = vpack.c.bf16 %v1892, %v1892
    %v1901 = vpack.c.bf16 %v1893, %v1893
    %v1902 = vpack.c.bf16 %v1894, %v1894
    %1903 = vst [vmem:[#allocation1] ss:$9 sm:$0xff] %v1405
    %s1904 = scalar_lea.vmem [#allocation1], 1
    %1905 = vst [vmem:[%s1904] ss:$9 sm:$0xff] %v1411
    %s1906 = scalar_lea.vmem [#allocation1], 2
    %1907 = vst [vmem:[%s1906] ss:$9 sm:$0xff] %v1412
    %s1908 = scalar_lea.vmem [#allocation1], 3
    %1909 = vst [vmem:[%s1908] ss:$9 sm:$0xff] %v1413
    %s1910 = scalar_lea.vmem [#allocation1], 4
    %1911 = vst [vmem:[%s1910] ss:$9 sm:$0xff] %v1414
    %v1912 = vld [vmem:[#allocation1] sm:$0xff]
    %1913 = vst [vmem:[#allocation1] ss:$9 sm:$0xff] %v1415
    %1914 = vst [vmem:[%s1904] ss:$9 sm:$0xff] %v1416
    %1915 = vst [vmem:[%s1906] ss:$9 sm:$0xff] %v1417
    %1916 = vst [vmem:[%s1908] ss:$9 sm:$0xff] %v1407
    %1917 = vst [vmem:[%s1910] ss:$9 sm:$0xff] %v1418
    %v1918 = vld [vmem:[#allocation1] sm:$0xff]
    %1919 = vst [vmem:[#allocation1] ss:$9 sm:$0xff] %v1420
    %1920 = vst [vmem:[%s1904] ss:$9 sm:$0xff] %v1422
    %1921 = vst [vmem:[%s1906] ss:$9 sm:$0xff] %v1424
    %1922 = vst [vmem:[%s1908] ss:$9 sm:$0xff] %v1426
    %1923 = vst [vmem:[%s1910] ss:$9 sm:$0xff] %v1428
    %v1924 = vld [vmem:[#allocation1] sm:$0xff]
    %1925 = vst [vmem:[#allocation1] ss:$9 sm:$0xff] %v1430
    %1926 = vst [vmem:[%s1904] ss:$9 sm:$0xff] %v1432
    %1927 = vst [vmem:[%s1906] ss:$9 sm:$0xff] %v1434
    %1928 = vst [vmem:[%s1908] ss:$9 sm:$0xff] %v1436
    %1929 = vst [vmem:[%s1910] ss:$9 sm:$0xff] %v1438
    %v1930 = vld [vmem:[#allocation1] sm:$0xff]
    %1931 = vst [vmem:[#allocation1] ss:$9 sm:$0xff] %v1440
    %1932 = vst [vmem:[%s1904] ss:$9 sm:$0xff] %v1442
    %1933 = vst [vmem:[%s1906] ss:$9 sm:$0xff] %v1444
    %1934 = vst [vmem:[%s1908] ss:$9 sm:$0xff] %v1446
    %1935 = vst [vmem:[%s1910] ss:$9 sm:$0xff] %v1448
    %v1936 = vld [vmem:[#allocation1] sm:$0xff]
    %1937 = vst [vmem:[#allocation1] ss:$9 sm:$0xff] %v1450
    %1938 = vst [vmem:[%s1904] ss:$9 sm:$0xff] %v1452
    %1939 = vst [vmem:[%s1906] ss:$9 sm:$0xff] %v1454
    %1940 = vst [vmem:[%s1908] ss:$9 sm:$0xff] %v1456
    %1941 = vst [vmem:[%s1910] ss:$9 sm:$0xff] %v1458
    %v1942 = vld [vmem:[#allocation1] sm:$0xff]
    %1943 = vst [vmem:[#allocation1] ss:$9 sm:$0xff] %v1460
    %1944 = vst [vmem:[%s1904] ss:$9 sm:$0xff] %v1462
    %1945 = vst [vmem:[%s1906] ss:$9 sm:$0xff] %v1464
    %1946 = vst [vmem:[%s1908] ss:$9 sm:$0xff] %v1466
    %1947 = vst [vmem:[%s1910] ss:$9 sm:$0xff] %v1468
    %v1948 = vld [vmem:[#allocation1] sm:$0xff]
    %1949 = vst [vmem:[#allocation1] ss:$9 sm:$0xff] %v1470
    %1950 = vst [vmem:[%s1904] ss:$9 sm:$0xff] %v1472
    %1951 = vst [vmem:[%s1906] ss:$9 sm:$0xff] %v1474
    %1952 = vst [vmem:[%s1908] ss:$9 sm:$0xff] %v1476
    %1953 = vst [vmem:[%s1910] ss:$9 sm:$0xff] %v1478
    %v1954 = vld [vmem:[#allocation1] sm:$0xff]
    %v1963 = vpack.c.bf16 %v1912, %v1912
    %v1964 = vpack.c.bf16 %v1918, %v1918
    %v1965 = vpack.c.bf16 %v1924, %v1924
    %v1966 = vpack.c.bf16 %v1930, %v1930
    %v1967 = vpack.c.bf16 %v1936, %v1936
    %v1968 = vpack.c.bf16 %v1942, %v1942
    %v1969 = vpack.c.bf16 %v1948, %v1948
    %v1970 = vpack.c.bf16 %v1954, %v1954
    %v1972 = vunpack.c.l.b16 %v1963
    %v1973 = vpack.c.b16 %v1972, %v1972
    %1974 = vrot.lane.b32.xlu0 %v1973, 64
    %v1975 = vpop.permute.xlu0 %1974
    %v1977 = vsel %vm845, %v1895, 0
    %v1980 = vand.u32 %v1975, %v852
    %1982 = vmatpush.bf16.msra.mxu0 0
    %1983 = vmatpush.bf16.msra.mxu0 0
    %1984 = vmatpush.bf16.msra.mxu0 0
    %1985 = vmatpush.bf16.msra.mxu0 0
    %1986 = vmatpush.bf16.msra.mxu0 0
    %1987 = vmatpush.bf16.msra.mxu0 0
    %1988 = vmatpush.bf16.msra.mxu0 0
    %1989 = vmatpush.bf16.msra.mxu0 %v1980
    %1990 = vmatmul.bf16.gmra.mxu0 %v1977
    %v1991 = vpop.f32.mrf.mxu0
    %v1992 = vadd.f32 0.0, %v1991
    %v1993 = vpop.f32.mrf.mxu0
    %1994 = vdwg.mxu0
    %v1996 = vunpack.c.l.b16 %v1964
    %v1997 = vpack.c.b16 %v1996, %v1996
    %1998 = vrot.lane.b32.xlu0 %v1997, 64
    %v1999 = vpop.permute.xlu0 %1998
    %v2001 = vsel %vm845, %v1896, 0
    %v2004 = vand.u32 %v1999, %v852
    %2006 = vmatpush.bf16.msra.mxu0 0
    %2007 = vmatpush.bf16.msra.mxu0 0
    %2008 = vmatpush.bf16.msra.mxu0 0
    %2009 = vmatpush.bf16.msra.mxu0 0
    %2010 = vmatpush.bf16.msra.mxu0 0
    %2011 = vmatpush.bf16.msra.mxu0 0
    %2012 = vmatpush.bf16.msra.mxu0 0
    %2013 = vmatpush.bf16.msra.mxu0 %v2004
    %2014 = vmatmul.bf16.gmra.mxu0 %v2001
    %v2015 = vpop.f32.mrf.mxu0
    %v2016 = vadd.f32 0.0, %v2015
    %v2017 = vpop.f32.mrf.mxu0
    %2018 = vdwg.mxu0
    %v2020 = vunpack.c.l.b16 %v1965
    %v2021 = vpack.c.b16 %v2020, %v2020
    %2022 = vrot.lane.b32.xlu0 %v2021, 64
    %v2023 = vpop.permute.xlu0 %2022
    %v2025 = vsel %vm845, %v1897, 0
    %v2028 = vand.u32 %v2023, %v852
    %2030 = vmatpush.bf16.msra.mxu0 0
    %2031 = vmatpush.bf16.msra.mxu0 0
    %2032 = vmatpush.bf16.msra.mxu0 0
    %2033 = vmatpush.bf16.msra.mxu0 0
    %2034 = vmatpush.bf16.msra.mxu0 0
    %2035 = vmatpush.bf16.msra.mxu0 0
    %2036 = vmatpush.bf16.msra.mxu0 0
    %2037 = vmatpush.bf16.msra.mxu0 %v2028
    %2038 = vmatmul.bf16.gmra.mxu0 %v2025
    %v2039 = vpop.f32.mrf.mxu0
    %v2040 = vadd.f32 0.0, %v2039
    %v2041 = vpop.f32.mrf.mxu0
    %2042 = vdwg.mxu0
    %v2044 = vunpack.c.l.b16 %v1966
    %v2045 = vpack.c.b16 %v2044, %v2044
    %2046 = vrot.lane.b32.xlu0 %v2045, 64
    %v2047 = vpop.permute.xlu0 %2046
    %v2049 = vsel %vm845, %v1898, 0
    %v2052 = vand.u32 %v2047, %v852
    %2054 = vmatpush.bf16.msra.mxu0 0
    %2055 = vmatpush.bf16.msra.mxu0 0
    %2056 = vmatpush.bf16.msra.mxu0 0
    %2057 = vmatpush.bf16.msra.mxu0 0
    %2058 = vmatpush.bf16.msra.mxu0 0
    %2059 = vmatpush.bf16.msra.mxu0 0
    %2060 = vmatpush.bf16.msra.mxu0 0
    %2061 = vmatpush.bf16.msra.mxu0 %v2052
    %2062 = vmatmul.bf16.gmra.mxu0 %v2049
    %v2063 = vpop.f32.mrf.mxu0
    %v2064 = vadd.f32 0.0, %v2063
    %v2065 = vpop.f32.mrf.mxu0
    %2066 = vdwg.mxu0
    %v2068 = vunpack.c.l.b16 %v1967
    %v2069 = vpack.c.b16 %v2068, %v2068
    %2070 = vrot.lane.b32.xlu0 %v2069, 64
    %v2071 = vpop.permute.xlu0 %2070
    %v2073 = vsel %vm845, %v1899, 0
    %v2076 = vand.u32 %v2071, %v852
    %2078 = vmatpush.bf16.msra.mxu0 0
    %2079 = vmatpush.bf16.msra.mxu0 0
    %2080 = vmatpush.bf16.msra.mxu0 0
    %2081 = vmatpush.bf16.msra.mxu0 0
    %2082 = vmatpush.bf16.msra.mxu0 0
    %2083 = vmatpush.bf16.msra.mxu0 0
    %2084 = vmatpush.bf16.msra.mxu0 0
    %2085 = vmatpush.bf16.msra.mxu0 %v2076
    %2086 = vmatmul.bf16.gmra.mxu0 %v2073
    %v2087 = vpop.f32.mrf.mxu0
    %v2088 = vadd.f32 0.0, %v2087
    %v2089 = vpop.f32.mrf.mxu0
    %2090 = vdwg.mxu0
    %v2092 = vunpack.c.l.b16 %v1968
    %v2093 = vpack.c.b16 %v2092, %v2092
    %2094 = vrot.lane.b32.xlu0 %v2093, 64
    %v2095 = vpop.permute.xlu0 %2094
    %v2097 = vsel %vm845, %v1900, 0
    %v2100 = vand.u32 %v2095, %v852
    %2102 = vmatpush.bf16.msra.mxu0 0
    %2103 = vmatpush.bf16.msra.mxu0 0
    %2104 = vmatpush.bf16.msra.mxu0 0
    %2105 = vmatpush.bf16.msra.mxu0 0
    %2106 = vmatpush.bf16.msra.mxu0 0
    %2107 = vmatpush.bf16.msra.mxu0 0
    %2108 = vmatpush.bf16.msra.mxu0 0
    %2109 = vmatpush.bf16.msra.mxu0 %v2100
    %2110 = vmatmul.bf16.gmra.mxu0 %v2097
    %v2111 = vpop.f32.mrf.mxu0
    %v2112 = vadd.f32 0.0, %v2111
    %v2113 = vpop.f32.mrf.mxu0
    %2114 = vdwg.mxu0
    %v2116 = vunpack.c.l.b16 %v1969
    %v2117 = vpack.c.b16 %v2116, %v2116
    %2118 = vrot.lane.b32.xlu0 %v2117, 64
    %v2119 = vpop.permute.xlu0 %2118
    %v2121 = vsel %vm845, %v1901, 0
    %v2124 = vand.u32 %v2119, %v852
    %2126 = vmatpush.bf16.msra.mxu0 0
    %2127 = vmatpush.bf16.msra.mxu0 0
    %2128 = vmatpush.bf16.msra.mxu0 0
    %2129 = vmatpush.bf16.msra.mxu0 0
    %2130 = vmatpush.bf16.msra.mxu0 0
    %2131 = vmatpush.bf16.msra.mxu0 0
    %2132 = vmatpush.bf16.msra.mxu0 0
    %2133 = vmatpush.bf16.msra.mxu0 %v2124
    %2134 = vmatmul.bf16.gmra.mxu0 %v2121
    %v2135 = vpop.f32.mrf.mxu0
    %v2136 = vadd.f32 0.0, %v2135
    %v2137 = vpop.f32.mrf.mxu0
    %2138 = vdwg.mxu0
    %v2140 = vunpack.c.l.b16 %v1970
    %v2141 = vpack.c.b16 %v2140, %v2140
    %2142 = vrot.lane.b32.xlu0 %v2141, 64
    %v2143 = vpop.permute.xlu0 %2142
    %v2145 = vsel %vm845, %v1902, 0
    %v2148 = vand.u32 %v2143, %v852
    %2150 = vmatpush.bf16.msra.mxu0 0
    %2151 = vmatpush.bf16.msra.mxu0 0
    %2152 = vmatpush.bf16.msra.mxu0 0
    %2153 = vmatpush.bf16.msra.mxu0 0
    %2154 = vmatpush.bf16.msra.mxu0 0
    %2155 = vmatpush.bf16.msra.mxu0 0
    %2156 = vmatpush.bf16.msra.mxu0 0
    %2157 = vmatpush.bf16.msra.mxu0 %v2148
    %2158 = vmatmul.bf16.gmra.mxu0 %v2145
    %v2159 = vpop.f32.mrf.mxu0
    %v2160 = vadd.f32 0.0, %v2159
    %v2161 = vpop.f32.mrf.mxu0
    %2162 = vdwg.mxu0
    %2165 = vrot.lane.b32.xlu0 %v2040, 8
    %v2166 = vpop.permute.xlu0 %2165
    %2167 = vrot.lane.b32.xlu0 %v2064, 8
    %v2168 = vpop.permute.xlu0 %2167
    %2173 = vrot.lane.b32.xlu0 %v2088, 16
    %v2174 = vpop.permute.xlu0 %2173
    %2175 = vrot.lane.b32.xlu0 %v2112, 16
    %v2176 = vpop.permute.xlu0 %2175
    %2181 = vrot.lane.b32.xlu0 %v2136, 24
    %v2182 = vpop.permute.xlu0 %2181
    %2183 = vrot.lane.b32.xlu0 %v2160, 24
    %v2184 = vpop.permute.xlu0 %2183
    %v2187 = vsel %vm487, %v1992, %v2166
    %v2188 = vsel %vm487, %v2016, %v2168
    %v2189 = vsel %vm1063, %v2187, %v2174
    %v2190 = vsel %vm1063, %v2188, %v2176
    %v2191 = vsel %vm1066, %v2189, %v2182
    %v2192 = vsel %vm1066, %v2190, %v2184
    %v2195 = vrot.slane %v2191, 1
    %v2196 = vrot.slane %v2191, 2
    %v2197 = vrot.slane %v2191, 3
    %v2198 = vrot.slane %v2191, 4
    %v2199 = vrot.slane %v2192, 1
    %v2200 = vrot.slane %v2192, 2
    %v2201 = vrot.slane %v2192, 3
    %v2202 = vrot.slane %v2192, 4
    %2203 = vst [vmem:[#allocation1] ss:$9 sm:$0xff] %v2191
    %s2204 = scalar_lea.vmem [#allocation1], 1
    %2205 = vst [vmem:[%s2204] ss:$9 sm:$0xff] %v2195
    %s2206 = scalar_lea.vmem [#allocation1], 2
    %2207 = vst [vmem:[%s2206] ss:$9 sm:$0xff] %v2196
    %s2208 = scalar_lea.vmem [#allocation1], 3
    %2209 = vst [vmem:[%s2208] ss:$9 sm:$0xff] %v2197
    %s2210 = scalar_lea.vmem [#allocation1], 4
    %2211 = vst [vmem:[%s2210] ss:$9 sm:$0xff] %v2198
    %s2212 = scalar_lea.vmem [#allocation1], 5
    %2213 = vst [vmem:[%s2212] ss:$9 sm:$0xff] %v2192
    %s2214 = scalar_lea.vmem [#allocation1], 6
    %2215 = vst [vmem:[%s2214] ss:$9 sm:$0xff] %v2199
    %s2216 = scalar_lea.vmem [#allocation1], 7
    %2217 = vst [vmem:[%s2216] ss:$9 sm:$0xff] %v2200
    %v2218 = vld [vmem:[#allocation1] sm:$0xff]
    %2219 = vst [vmem:[#allocation1] ss:$9 sm:$0xff] %v2201
    %2220 = vst [vmem:[%s2204] ss:$9 sm:$0xff] %v2202
    %v2221 = vld [vmem:[#allocation1] sm:$0xff]
    %v2224 = vpack.c.bf16 %v2221, %v2218
    %s2225 = scalar_lea.vmem %s6, 16
    %v2226 = vld [vmem:[%s2225] sm:$0xf]
    %v2227 = vld [vmem:[%s2225 + $0x4] sm:$0xf]
    %v2228 = vld [vmem:[%s2225 + $0x8] sm:$0xf]
    %v2229 = vld [vmem:[%s2225 + $0xc] sm:$0xf]
    %v2234 = vunpack.c.l.b16 %v2226
    %v2235 = vunpack.c.l.b16 %v2227
    %v2236 = vunpack.c.l.b16 %v2228
    %v2237 = vunpack.c.l.b16 %v2229
    %v2238 = vpack.c.b16 %v2235, %v2234
    %v2239 = vpack.c.b16 %v2237, %v2236
    %v2243 = vsel %vm129, %v2224, 0
    %2245 = vmatpush.bf16.msra.mxu0 0
    %2246 = vmatpush.bf16.msra.mxu0 0
    %2247 = vmatpush.bf16.msra.mxu0 0
    %2248 = vmatpush.bf16.msra.mxu0 0
    %2249 = vmatpush.bf16.msra.mxu0 0
    %2250 = vmatpush.bf16.msra.mxu0 0
    %2251 = vmatpush.bf16.msra.mxu0 %v2239
    %2252 = vmatpush.bf16.msra.mxu0 %v2238
    %2253 = vmatmul.bf16.gmra.mxu0 %v2243
    %v2254 = vpop.f32.mrf.mxu0
    %v2255 = vadd.f32 0.0, %v2254
    %v2256 = vpop.f32.mrf.mxu0
    %v2257 = vadd.f32 0.0, %v2256
    %2258 = vdwg.mxu0
    %v2259 = vadd.f32 %v1323, %v2255
    %v2260 = vadd.f32 %v1324, %v2257
    %s2261 = scalar_lea.vmem %s7, 1
    %v2262 = vld [vmem:[%s2261] sm:$0x1]
    %v2264 = vperm.slane %v2262, 0
    %v2266 = vadd.f32 %v2259, %v2264
    %v2267 = vadd.f32 %v2260, %v2264
    %v2268 = vsel %vm129, %v2266, 0.0
    %2269 = vadd.xlane.f32.xlu0 %v2268
    %v2270 = vpop.xlane.xlu0 %2269
    %v2271 = vsel %vm133, %v2267, 0.0
    %2272 = vadd.xlane.f32.xlu0 %v2271
    %v2273 = vpop.xlane.xlu0 %2272
    %v2274 = vmul.f32 %v2270, %v143
    %v2275 = vmul.f32 %v2273, %v143
    %v2276 = vsub.f32 %v2266, %v2274
    %v2277 = vsub.f32 %v2267, %v2275
    %v2278 = vmul.f32 %v2276, %v2276
    %v2279 = vmul.f32 %v2277, %v2277
    %v2280 = vsel %vm129, %v2278, 0.0
    %2281 = vadd.xlane.f32.xlu0 %v2280
    %v2282 = vpop.xlane.xlu0 %2281
    %v2283 = vsel %vm133, %v2279, 0.0
    %2284 = vadd.xlane.f32.xlu0 %v2283
    %v2285 = vpop.xlane.xlu0 %2284
    %v2286 = vmul.f32 %v2282, %v143
    %v2287 = vmul.f32 %v2285, %v143
    %v2288 = vadd.f32 %v2286, 1e-05
    %v2289 = vadd.f32 %v2287, 1e-05
    %v2290 = vrsqrt.pop %v2288
    %v2291 = vmul.f32 %v2290, %v2288
    %v2292 = vmul.f32 %v2291, %v2290
    %v2293 = vmul.f32 0.5, %v2292
    %v2294 = vsub.f32 1.5, %v2293
    %v2295 = vmul.f32 %v2290, %v2294
    %vm2296 = vweird.f32 %v2288
    %vm2297 = vweird.f32 %v2290
    %vm2298 = vmor %vm2296, %vm2297
    %v2299 = vsel %vm2298, %v2290, %v2295
    %v2300 = vrsqrt.pop %v2289
    %v2301 = vmul.f32 %v2300, %v2289
    %v2302 = vmul.f32 %v2301, %v2300
    %v2303 = vmul.f32 0.5, %v2302
    %v2304 = vsub.f32 1.5, %v2303
    %v2305 = vmul.f32 %v2300, %v2304
    %vm2306 = vweird.f32 %v2289
    %vm2307 = vweird.f32 %v2300
    %vm2308 = vmor %vm2306, %vm2307
    %v2309 = vsel %vm2308, %v2300, %v2305
    %v2310 = vmul.f32 %v2276, %v2299
    %v2311 = vmul.f32 %v2277, %v2309
    %v2312 = vpack.c.bf16 %v2311, %v2310
    %s2313 = scalar_lea.vmem %s8, 16
    %v2314 = vld [vmem:[%s2313] sm:$0xf]
    %v2315 = vld [vmem:[%s2313 + $0x4] sm:$0xf]
    %v2316 = vld [vmem:[%s2313 + $0x8] sm:$0xf]
    %v2317 = vld [vmem:[%s2313 + $0xc] sm:$0xf]
    %s2318 = scalar_lea.vmem %s9, 1
    %v2319 = vld [vmem:[%s2318] sm:$0x1]
    %v2321 = vperm.slane %v2319, 0
    %v2327 = vunpack.c.l.b16 %v2314
    %v2328 = vunpack.c.l.b16 %v2315
    %v2329 = vunpack.c.l.b16 %v2316
    %v2330 = vunpack.c.l.b16 %v2317
    %v2331 = vpack.c.b16 %v2328, %v2327
    %v2332 = vpack.c.b16 %v2330, %v2329
    %v2336 = vsel %vm129, %v2312, 0
    %2338 = vmatpush.bf16.msra.mxu0 0
    %2339 = vmatpush.bf16.msra.mxu0 0
    %2340 = vmatpush.bf16.msra.mxu0 0
    %2341 = vmatpush.bf16.msra.mxu0 0
    %2342 = vmatpush.bf16.msra.mxu0 0
    %2343 = vmatpush.bf16.msra.mxu0 0
    %2344 = vmatpush.bf16.msra.mxu0 %v2332
    %2345 = vmatpush.bf16.msra.mxu0 %v2331
    %2346 = vmatmul.bf16.gmra.mxu0 %v2336
    %v2347 = vpop.f32.mrf.mxu0
    %v2348 = vadd.f32 %v2321, %v2347
    %v2349 = vpop.f32.mrf.mxu0
    %v2350 = vadd.f32 %v2321, %v2349
    %2351 = vdwg.mxu0
    %v2352 = vmul.f32 %v2348, 1.702
    %v2353 = vmul.f32 %v2350, 1.702
    %v2354 = vxor.u32 %v2352, 2147483648
    %v2355 = vxor.u32 %v2353, 2147483648
    %v2356 = vmul.f32 %v2354, 1.442695
    %v2357 = vpow.pop %v2356
    %v2358 = vmul.f32 %v2355, 1.442695
    %v2359 = vpow.pop %v2358
    %v2360 = vadd.f32 %v2357, 1.0
    %v2361 = vadd.f32 %v2359, 1.0
    %v2362 = vrcp.pop %v2360
    %v2363 = vmul.f32 %v2360, %v2362
    %v2364 = vsub.f32 1.0, %v2363
    %v2365 = vmul.f32 %v2362, %v2364
    %v2366 = vadd.f32 %v2362, %v2365
    %vm2367 = vweird.f32 %v2360
    %vm2368 = vweird.f32 %v2362
    %vm2369 = vmor %vm2367, %vm2368
    %v2370 = vsel %vm2369, %v2362, %v2366
    %v2371 = vand.u32 2147483647, %v2360
    %vm2372 = vcmp.eq.f32.partialorder %v2371, 8.507059e+37
    %v2373 = vand.u32 %v2360, 2147483648
    %v2374 = vor.u32 1.1754944e-38, %v2373
    %v2375 = vsel %vm2372, %v2374, %v2370
    %v2376 = vmul.f32 1.0, %v2375
    %v2377 = vrcp.pop %v2361
    %v2378 = vmul.f32 %v2361, %v2377
    %v2379 = vsub.f32 1.0, %v2378
    %v2380 = vmul.f32 %v2377, %v2379
    %v2381 = vadd.f32 %v2377, %v2380
    %vm2382 = vweird.f32 %v2361
    %vm2383 = vweird.f32 %v2377
    %vm2384 = vmor %vm2382, %vm2383
    %v2385 = vsel %vm2384, %v2377, %v2381
    %v2386 = vand.u32 2147483647, %v2361
    %vm2387 = vcmp.eq.f32.partialorder %v2386, 8.507059e+37
    %v2388 = vand.u32 %v2361, 2147483648
    %v2389 = vor.u32 1.1754944e-38, %v2388
    %v2390 = vsel %vm2387, %v2389, %v2385
    %v2391 = vmul.f32 1.0, %v2390
    %v2392 = vmul.f32 %v2348, %v2376
    %v2393 = vmul.f32 %v2350, %v2391
    %v2394 = vpack.c.bf16 %v2393, %v2392
    %s2395 = scalar_lea.vmem %s10, 32
    %v2396 = vld [vmem:[%s2395] sm:$0xf]
    %v2397 = vld [vmem:[%s2395 + $0x4] sm:$0xf]
    %v2398 = vld [vmem:[%s2395 + $0x8] sm:$0xf]
    %v2399 = vld [vmem:[%s2395 + $0xc] sm:$0xf]
    %v2400 = vld [vmem:[%s2395 + $0x10] sm:$0xf]
    %v2401 = vld [vmem:[%s2395 + $0x14] sm:$0xf]
    %v2402 = vld [vmem:[%s2395 + $0x18] sm:$0xf]
    %v2403 = vld [vmem:[%s2395 + $0x1c] sm:$0xf]
    %v2412 = vunpack.c.l.b16 %v2396
    %v2413 = vunpack.c.l.b16 %v2397
    %v2414 = vunpack.c.l.b16 %v2398
    %v2415 = vunpack.c.l.b16 %v2399
    %v2416 = vunpack.c.l.b16 %v2400
    %v2417 = vunpack.c.l.b16 %v2401
    %v2418 = vunpack.c.l.b16 %v2402
    %v2419 = vunpack.c.l.b16 %v2403
    %v2420 = vpack.c.b16 %v2413, %v2412
    %v2421 = vpack.c.b16 %v2415, %v2414
    %v2422 = vpack.c.b16 %v2417, %v2416
    %v2423 = vpack.c.b16 %v2419, %v2418
    %v2429 = vsel %vm1299, %v2394, 0
    %2431 = vmatpush.bf16.msra.mxu0 0
    %2432 = vmatpush.bf16.msra.mxu0 0
    %2433 = vmatpush.bf16.msra.mxu0 0
    %2434 = vmatpush.bf16.msra.mxu0 0
    %2435 = vmatpush.bf16.msra.mxu0 %v2423
    %2436 = vmatpush.bf16.msra.mxu0 %v2422
    %2437 = vmatpush.bf16.msra.mxu0 %v2421
    %2438 = vmatpush.bf16.msra.mxu0 %v2420
    %2439 = vmatmul.bf16.gmra.mxu0 %v2429
    %v2440 = vpop.f32.mrf.mxu0
    %v2441 = vadd.f32 0.0, %v2440
    %v2442 = vpop.f32.mrf.mxu0
    %v2443 = vadd.f32 0.0, %v2442
    %2444 = vdwg.mxu0
    %v2445 = vadd.f32 %v2266, %v2441
    %v2446 = vadd.f32 %v2267, %v2443
    %s2447 = scalar_lea.vmem %s11, 1
    %v2448 = vld [vmem:[%s2447] sm:$0x1]
    %v2450 = vperm.slane %v2448, 0
    %v2452 = vadd.f32 %v2445, %v2450
    %v2453 = vadd.f32 %v2446, %v2450
    %v2456 = vrot.slane %v2452, 1
    %v2457 = vrot.slane %v2452, 2
    %v2458 = vrot.slane %v2452, 3
    %v2459 = vrot.slane %v2452, 4
    %v2460 = vrot.slane %v2452, 6
    %v2461 = vrot.slane %v2452, 7
    %v2462 = vrot.slane %v2453, 1
    %2463 = vst [vmem:[#allocation1] ss:$9 sm:$0xff] %v2456
    %s2464 = scalar_lea.vmem [#allocation1], 1
    %2465 = vst [vmem:[%s2464] ss:$9 sm:$0xff] %v2457
    %s2466 = scalar_lea.vmem [#allocation1], 2
    %2467 = vst [vmem:[%s2466] ss:$9 sm:$0xff] %v2458
    %s2468 = scalar_lea.vmem [#allocation1], 3
    %2469 = vst [vmem:[%s2468] ss:$9 sm:$0xff] %v2459
    %v2470 = vld [vmem:[#allocation1] sm:$0xff]
    %2471 = vst [vmem:[#allocation1] ss:$9 sm:$0xff] %v2460
    %2472 = vst [vmem:[%s2464] ss:$9 sm:$0xff] %v2461
    %2473 = vst [vmem:[%s2466] ss:$9 sm:$0xff] %v2453
    %2474 = vst [vmem:[%s2468] ss:$9 sm:$0xff] %v2462
    %v2475 = vld [vmem:[#allocation1] sm:$0xff]
    %vm2478 = vcmask 257024
    %2479 = vst.msk [vmem:[#allocation2] sm:$0xf] %vm2478, %v2470
    %2480 = vst.msk [vmem:[#allocation2 + $0x4] sm:$0xf] %vm2478, %v2475
    // Predicated region
    $region50: #{tpu_custom_call.1} parent=1 // pred_check
      _
    $region51: #{tpu_custom_call.1} parent=1 // pred_check_branch
      %2482 = sbr.rel (0) target = $region53
    $region52: #{tpu_custom_call.1} parent=1 // pred_region
      %2484 = vsyncadd [#allocation3], 0
      %s2485 = sshll.u32 [#allocation2], 4
      %s2486 = int_to_ptr.vmem [resolvable:$true] %s2485
      %s2487 = sshll.u32 %s12, 4
      %s2488 = int_to_ptr.hbm [resolvable:$true] %s2487
      %2493 = dma.vmem_to_hbm [thread:$0]  %s2486, 128, %s2488, [#allocation3], 64, 64, 4
    $region53: #{tpu_custom_call.1} parent=1 // pred_fallthru
      _
    // Predicated region
    $region54: #{tpu_custom_call.1} parent=1 // pred_check
      _
    $region55: #{tpu_custom_call.1} parent=1 // pred_check_branch
      %2495 = sbr.rel (0) target = $region57
    $region56: #{tpu_custom_call.1} parent=1 // pred_region
      %2497 = dma.done [#allocation3], 128
    $region57: #{tpu_custom_call.1} parent=1 // pred_fallthru
      _
    %2498 = vsyncpa [#allocation3], 1

</llo_original>
